<compile_context>
chip_gen: v5e
topology: v5e:2x2
jax: 0.10.0
libtpu: 0.0.40
codegen_flags: <defaults>
</compile_context>

<pallas_src>
import jax
import jax.numpy as jnp
from jax.experimental import pallas as pl
from jax.experimental.pallas import tpu as pltpu


def po_ord_cl_kernel(xT_ref, w1_ref, b1_ref, w2_ref, b2_ref, w3_ref, b3_ref,
                     wu_ref, bu_ref, wl_ref, bl_ref, out_ref):
    """Batch-on-lanes forward: activations are (features, TILE_N)."""
    cdt = w1_ref.dtype  # MXU-operand dtype (bf16 by default, f32 optional)

    # Hidden layers: h = sigmoid(W @ h + b); f32 accumulate, f32 VPU/EUP.
    h = jax.nn.sigmoid(
        jnp.dot(w1_ref[...], xT_ref[...], preferred_element_type=jnp.float32)
        + b1_ref[...])
    h = jax.nn.sigmoid(
        jnp.dot(w2_ref[...], h.astype(cdt), preferred_element_type=jnp.float32)
        + b2_ref[...])
    h = jax.nn.sigmoid(
        jnp.dot(w3_ref[...], h.astype(cdt), preferred_element_type=jnp.float32)
        + b3_ref[...])
    hc = h.astype(cdt)

    # Fused g4 + cutpoints + boundary columns (transposed):
    #   upper[j, n] = sigmoid(tmp[n, j+1]),  lower[j, n] = sigmoid(tmp[n, j])
    # with tmp = [-1e6, bi - (w4.h + b4), +1e6].  The +-1e6 rows saturate the
    # sigmoid exactly (0.0 / 1.0) in float32, so this is an exact rewrite.
    upper = jax.nn.sigmoid(
        jnp.dot(wu_ref[...], hc, preferred_element_type=jnp.float32)
        + bu_ref[...])
    lower = jax.nn.sigmoid(
        jnp.dot(wl_ref[...], hc, preferred_element_type=jnp.float32)
        + bl_ref[...])

    out_ref[...] = upper - lower           # (K, TILE_N), lane-dense store


def po_ord_cl_forward(x, params, *, tile_n=8192, matmul_dtype=jnp.bfloat16):
    """Pallas forward. params = (w1,b1,w2,b2,w3,b3,w4,b4,tmp_bi) in torch
    layout: w (out, in), b (out,), tmp_bi (K-2,).  Returns (N, K) float32."""
    w1, b1, w2, b2, w3, b3, w4, b4, tmp_bi = params
    n, d = x.shape
    m = w1.shape[0]
    k = int(tmp_bi.shape[0]) + 2  # K
    f32 = jnp.float32

    # ---- batch-independent O(K*M) parameter precompute (plain JAX) ---------
    # cutpoints: bi[0] = 0, bi[j] = sum_{i<j} exp(tmp_bi[i])
    bi = jnp.concatenate([jnp.zeros((1,), f32),
                          jnp.cumsum(jnp.exp(tmp_bi.astype(f32)))])   # (K-1,)
    cut = bi - b4.astype(f32).reshape(())                             # (K-1,)
    big = jnp.full((1,), 1e6, f32)
    neg_w4 = -w4.astype(f32).reshape(1, m)
    zrow = jnp.zeros((1, m), f32)
    wu = jnp.concatenate([jnp.broadcast_to(neg_w4, (k - 1, m)), zrow], axis=0)
    wl = jnp.concatenate([zrow, jnp.broadcast_to(neg_w4, (k - 1, m))], axis=0)
    bu = jnp.concatenate([cut, big]).reshape(k, 1)
    bl = jnp.concatenate([-big, cut]).reshape(k, 1)

    # bf16 MXU operands (f32 accumulate); biases / elementwise stay f32.
    w1c = w1.astype(matmul_dtype)
    w2c = w2.astype(matmul_dtype)
    w3c = w3.astype(matmul_dtype)
    wuc = wu.astype(matmul_dtype)
    wlc = wl.astype(matmul_dtype)
    b1c = b1.astype(f32).reshape(m, 1)
    b2c = b2.astype(f32).reshape(m, 1)
    b3c = b3.astype(f32).reshape(m, 1)

    # Batch-on-lanes input: x^T, with the bf16 cast fused into the transpose.
    xT = x.T.astype(matmul_dtype)

    # ---- batch tiling on the lane axis --------------------------------------
    if n <= 256:
        tile = n                               # single full-extent lane block
    else:
        # large tiles amortize per-grid-step overhead; >=2 tiles keeps both
        # v7x TensorCores busy (irrelevant but harmless on v5e/v6e).
        tile = min(int(tile_n), pl.cdiv(n, 2))
        tile = max(128, (tile // 128) * 128)   # lane axis: multiple of 128
    grid = (pl.cdiv(n, tile),)

    col = lambda shape: pl.BlockSpec(shape, lambda i: (0, i))   # batch-tiled
    rep = lambda shape: pl.BlockSpec(shape, lambda i: (0, 0))   # VMEM-resident

    nbytes = lambda a: int(a.size) * a.dtype.itemsize
    weight_bytes = sum(nbytes(a) for a in
                       (w1c, b1c, w2c, b2c, w3c, b3c, wuc, bu, wlc, bl))
    cost = pl.CostEstimate(
        flops=2 * n * (d * m + 2 * m * m + 2 * k * m),
        transcendentals=n * (3 * m + 2 * k),
        bytes_accessed=nbytes(xT) + n * k * 4 + weight_bytes)

    out_t = pl.pallas_call(
        po_ord_cl_kernel,
        out_shape=jax.ShapeDtypeStruct((k, n), f32),
        grid=grid,
        in_specs=[
            col((d, tile)),                        # x^T
            rep((m, d)), rep((m, 1)),              # g1
            rep((m, m)), rep((m, 1)),              # g2
            rep((m, m)), rep((m, 1)),              # g3
            rep((k, m)), rep((k, 1)),              # fused upper: g4+cutpoints, +1e6
            rep((k, m)), rep((k, 1)),              # fused lower: g4+cutpoints, -1e6
        ],
        out_specs=col((k, tile)),
        compiler_params=pltpu.CompilerParams(
            dimension_semantics=("parallel",)),
        cost_estimate=cost,
    )(xT, w1c, b1c, w2c, b2c, w3c, b3c, wuc, bu, wlc, bl)

    return out_t.T                                 # (N, K)


def po_ord_cl_reference(x, params, k_classes):
    """Plain-JAX transcription of the PyTorch forward (with its Python loop)."""
    w1, b1, w2, b2, w3, b3, w4, b4, tmp_bi = params
    g = jax.nn.sigmoid(x @ w1.T + b1)
    g = jax.nn.sigmoid(g @ w2.T + b2)
    g = jax.nn.sigmoid(g @ w3.T + b3)
    g = g @ w4.T + b4                                 # (N, 1)
    bi = [jnp.zeros((), jnp.float32)]
    for kk in range(1, k_classes - 1):
        bi.append(bi[-1] + jnp.exp(tmp_bi[kk - 1]))
    bi = jnp.stack(bi)                                # (K-1,)
    tmp = bi[None, :] - g                             # (N, K-1)
    big = (10.0 ** 6) * jnp.ones((x.shape[0], 1), jnp.float32)
    tmp = jnp.concatenate([-big, tmp, big], axis=1)   # (N, K+1)
    sg = jax.nn.sigmoid(tmp)
    return sg[:, 1:] - sg[:, :-1]                     # (N, K)


if __name__ == "__main__":
    # Small shapes consistent with the module: batch N, feature dim d,
    # hidden width M, number of ordinal classes K.
    N, d, M, K = 512, 16, 32, 5

    key = jax.random.PRNGKey(0)
    ks = jax.random.split(key, 10)
    x = jax.random.normal(ks[0], (N, d), jnp.float32)

    # torch.nn.init.normal_(mean=0, std=0.1); torch layout: w (out, in), b (out,)
    w1 = 0.1 * jax.random.normal(ks[1], (M, d), jnp.float32)
    b1 = 0.1 * jax.random.normal(ks[2], (M,), jnp.float32)
    w2 = 0.1 * jax.random.normal(ks[3], (M, M), jnp.float32)
    b2 = 0.1 * jax.random.normal(ks[4], (M,), jnp.float32)
    w3 = 0.1 * jax.random.normal(ks[5], (M, M), jnp.float32)
    b3 = 0.1 * jax.random.normal(ks[6], (M,), jnp.float32)
    w4 = 0.1 * jax.random.normal(ks[7], (1, M), jnp.float32)
    b4 = 0.1 * jax.random.normal(ks[8], (1,), jnp.float32)
    # tmp_bi is initialized to zeros in the module; use small random values
    # here so the cutpoint cumsum path is actually exercised.
    tmp_bi = 0.1 * jax.random.normal(ks[9], (K - 2,), jnp.float32)
    params = (w1, b1, w2, b2, w3, b3, w4, b4, tmp_bi)

    ref = po_ord_cl_reference(x, params, K)

    # f32 MXU path: tight semantic check (N=512 -> two 256-row lane tiles).
    out_f32 = jax.block_until_ready(
        po_ord_cl_forward(x, params, matmul_dtype=jnp.float32))
    assert out_f32.shape == (N, K), out_f32.shape
    assert jnp.allclose(out_f32, ref, atol=1e-4, rtol=1e-4), (
        "f32 kernel mismatch vs reference")

    # bf16-operand path (default, the performance configuration): looser
    # tolerance for bf16 rounding through the three chained matmuls.
    out = jax.block_until_ready(po_ord_cl_forward(x, params))
    assert out.shape == (N, K), out.shape
    assert jnp.allclose(out, ref, atol=5e-3, rtol=5e-3), (
        "bf16 kernel mismatch vs reference")
    # rows are probability distributions (telescoping sum)
    assert jnp.allclose(jnp.sum(out, axis=1), 1.0, atol=1e-5)

    # Small-batch path: single full-extent lane tile (N <= 256).
    out_small = jax.block_until_ready(po_ord_cl_forward(x[:200], params))
    assert out_small.shape == (200, K), out_small.shape
    assert jnp.allclose(out_small, ref[:200], atol=5e-3, rtol=5e-3), (
        "small-batch kernel mismatch vs reference")

    print("KERNEL_OK")
</pallas_src>

<mosaic_0001>
module attributes {stable_mosaic.version = 11 : i64} {
  func.func @po_ord_cl_kernel(%arg0: i32, %arg1: memref<16x256xf32, #tpu.memory_space<vmem>>, %arg2: memref<32x16xf32, #tpu.memory_space<vmem>>, %arg3: memref<32x1xf32, #tpu.memory_space<vmem>>, %arg4: memref<32x32xf32, #tpu.memory_space<vmem>>, %arg5: memref<32x1xf32, #tpu.memory_space<vmem>>, %arg6: memref<32x32xf32, #tpu.memory_space<vmem>>, %arg7: memref<32x1xf32, #tpu.memory_space<vmem>>, %arg8: memref<5x32xf32, #tpu.memory_space<vmem>>, %arg9: memref<5x1xf32, #tpu.memory_space<vmem>>, %arg10: memref<5x32xf32, #tpu.memory_space<vmem>>, %arg11: memref<5x1xf32, #tpu.memory_space<vmem>>, %arg12: memref<5x256xf32, #tpu.memory_space<vmem>>) attributes {dimension_semantics = [#tpu.dimension_semantics<parallel>], iteration_bounds = array<i64: 2>, scalar_prefetch = 0 : i64, scratch_operands = 0 : i64, tpu.core_type = #tpu.core_type<tc>, window_params = [{transform_indices = @transform_0, window_bounds = array<i64: 16, 256>}, {pipeline_mode = #tpu.pipeline_mode<synchronous>, transform_indices = @transform_1, window_bounds = array<i64: 32, 16>}, {pipeline_mode = #tpu.pipeline_mode<synchronous>, transform_indices = @transform_2, window_bounds = array<i64: 32, 1>}, {pipeline_mode = #tpu.pipeline_mode<synchronous>, transform_indices = @transform_3, window_bounds = array<i64: 32, 32>}, {pipeline_mode = #tpu.pipeline_mode<synchronous>, transform_indices = @transform_4, window_bounds = array<i64: 32, 1>}, {pipeline_mode = #tpu.pipeline_mode<synchronous>, transform_indices = @transform_5, window_bounds = array<i64: 32, 32>}, {pipeline_mode = #tpu.pipeline_mode<synchronous>, transform_indices = @transform_6, window_bounds = array<i64: 32, 1>}, {pipeline_mode = #tpu.pipeline_mode<synchronous>, transform_indices = @transform_7, window_bounds = array<i64: 5, 32>}, {pipeline_mode = #tpu.pipeline_mode<synchronous>, transform_indices = @transform_8, window_bounds = array<i64: 5, 1>}, {pipeline_mode = #tpu.pipeline_mode<synchronous>, transform_indices = @transform_9, window_bounds = array<i64: 5, 32>}, {pipeline_mode = #tpu.pipeline_mode<synchronous>, transform_indices = @transform_10, window_bounds = array<i64: 5, 1>}, {transform_indices = @transform_11, window_bounds = array<i64: 5, 256>}]} {
    %c0 = arith.constant 0 : index
    %c0_0 = arith.constant 0 : index
    %0 = vector.load %arg2[%c0, %c0_0] : memref<32x16xf32, #tpu.memory_space<vmem>>, vector<32x16xf32>
    %c0_1 = arith.constant 0 : index
    %c0_2 = arith.constant 0 : index
    %1 = vector.load %arg1[%c0_1, %c0_2] : memref<16x256xf32, #tpu.memory_space<vmem>>, vector<16x256xf32>
    %cst = arith.constant dense<0.000000e+00> : vector<32x256xf32>
    %2 = tpu.matmul %0, %1, %cst {dimension_numbers = #tpu.dot_dimension_numbers<[1], [0], [0], [1], [0, 0, 1, 1], [], []>} : vector<32x16xf32>, vector<16x256xf32>, vector<32x256xf32> -> vector<32x256xf32>
    %c0_3 = arith.constant 0 : index
    %c0_4 = arith.constant 0 : index
    %3 = vector.load %arg3[%c0_3, %c0_4] : memref<32x1xf32, #tpu.memory_space<vmem>>, vector<32x1xf32>
    %4 = vector.broadcast %3 : vector<32x1xf32> to vector<32x256xf32>
    %5 = arith.addf %2, %4 : vector<32x256xf32>
    %6 = arith.negf %5 : vector<32x256xf32>
    %7 = math.exp %6 : vector<32x256xf32>
    %cst_5 = arith.constant 1.000000e+00 : f32
    %8 = vector.broadcast %cst_5 : f32 to vector<32x256xf32>
    %9 = arith.addf %8, %7 : vector<32x256xf32>
    %10 = arith.divf %8, %9 : vector<32x256xf32>
    %c0_6 = arith.constant 0 : index
    %c0_7 = arith.constant 0 : index
    %11 = vector.load %arg4[%c0_6, %c0_7] : memref<32x32xf32, #tpu.memory_space<vmem>>, vector<32x32xf32>
    %cst_8 = arith.constant dense<0.000000e+00> : vector<32x256xf32>
    %12 = tpu.matmul %11, %10, %cst_8 {dimension_numbers = #tpu.dot_dimension_numbers<[1], [0], [0], [1], [0, 0, 1, 1], [], []>} : vector<32x32xf32>, vector<32x256xf32>, vector<32x256xf32> -> vector<32x256xf32>
    %c0_9 = arith.constant 0 : index
    %c0_10 = arith.constant 0 : index
    %13 = vector.load %arg5[%c0_9, %c0_10] : memref<32x1xf32, #tpu.memory_space<vmem>>, vector<32x1xf32>
    %14 = vector.broadcast %13 : vector<32x1xf32> to vector<32x256xf32>
    %15 = arith.addf %12, %14 : vector<32x256xf32>
    %16 = arith.negf %15 : vector<32x256xf32>
    %17 = math.exp %16 : vector<32x256xf32>
    %cst_11 = arith.constant 1.000000e+00 : f32
    %18 = vector.broadcast %cst_11 : f32 to vector<32x256xf32>
    %19 = arith.addf %18, %17 : vector<32x256xf32>
    %20 = arith.divf %18, %19 : vector<32x256xf32>
    %c0_12 = arith.constant 0 : index
    %c0_13 = arith.constant 0 : index
    %21 = vector.load %arg6[%c0_12, %c0_13] : memref<32x32xf32, #tpu.memory_space<vmem>>, vector<32x32xf32>
    %cst_14 = arith.constant dense<0.000000e+00> : vector<32x256xf32>
    %22 = tpu.matmul %21, %20, %cst_14 {dimension_numbers = #tpu.dot_dimension_numbers<[1], [0], [0], [1], [0, 0, 1, 1], [], []>} : vector<32x32xf32>, vector<32x256xf32>, vector<32x256xf32> -> vector<32x256xf32>
    %c0_15 = arith.constant 0 : index
    %c0_16 = arith.constant 0 : index
    %23 = vector.load %arg7[%c0_15, %c0_16] : memref<32x1xf32, #tpu.memory_space<vmem>>, vector<32x1xf32>
    %24 = vector.broadcast %23 : vector<32x1xf32> to vector<32x256xf32>
    %25 = arith.addf %22, %24 : vector<32x256xf32>
    %26 = arith.negf %25 : vector<32x256xf32>
    %27 = math.exp %26 : vector<32x256xf32>
    %cst_17 = arith.constant 1.000000e+00 : f32
    %28 = vector.broadcast %cst_17 : f32 to vector<32x256xf32>
    %29 = arith.addf %28, %27 : vector<32x256xf32>
    %30 = arith.divf %28, %29 : vector<32x256xf32>
    %c0_18 = arith.constant 0 : index
    %c0_19 = arith.constant 0 : index
    %31 = vector.load %arg8[%c0_18, %c0_19] : memref<5x32xf32, #tpu.memory_space<vmem>>, vector<5x32xf32>
    %cst_20 = arith.constant dense<0.000000e+00> : vector<5x256xf32>
    %32 = tpu.matmul %31, %30, %cst_20 {dimension_numbers = #tpu.dot_dimension_numbers<[1], [0], [0], [1], [0, 0, 1, 1], [], []>} : vector<5x32xf32>, vector<32x256xf32>, vector<5x256xf32> -> vector<5x256xf32>
    %c0_21 = arith.constant 0 : index
    %c0_22 = arith.constant 0 : index
    %33 = vector.load %arg9[%c0_21, %c0_22] : memref<5x1xf32, #tpu.memory_space<vmem>>, vector<5x1xf32>
    %34 = vector.broadcast %33 : vector<5x1xf32> to vector<5x256xf32>
    %35 = arith.addf %32, %34 : vector<5x256xf32>
    %36 = arith.negf %35 : vector<5x256xf32>
    %37 = math.exp %36 : vector<5x256xf32>
    %cst_23 = arith.constant 1.000000e+00 : f32
    %38 = vector.broadcast %cst_23 : f32 to vector<5x256xf32>
    %39 = arith.addf %38, %37 : vector<5x256xf32>
    %40 = arith.divf %38, %39 : vector<5x256xf32>
    %c0_24 = arith.constant 0 : index
    %c0_25 = arith.constant 0 : index
    %41 = vector.load %arg10[%c0_24, %c0_25] : memref<5x32xf32, #tpu.memory_space<vmem>>, vector<5x32xf32>
    %cst_26 = arith.constant dense<0.000000e+00> : vector<5x256xf32>
    %42 = tpu.matmul %41, %30, %cst_26 {dimension_numbers = #tpu.dot_dimension_numbers<[1], [0], [0], [1], [0, 0, 1, 1], [], []>} : vector<5x32xf32>, vector<32x256xf32>, vector<5x256xf32> -> vector<5x256xf32>
    %c0_27 = arith.constant 0 : index
    %c0_28 = arith.constant 0 : index
    %43 = vector.load %arg11[%c0_27, %c0_28] : memref<5x1xf32, #tpu.memory_space<vmem>>, vector<5x1xf32>
    %44 = vector.broadcast %43 : vector<5x1xf32> to vector<5x256xf32>
    %45 = arith.addf %42, %44 : vector<5x256xf32>
    %46 = arith.negf %45 : vector<5x256xf32>
    %47 = math.exp %46 : vector<5x256xf32>
    %cst_29 = arith.constant 1.000000e+00 : f32
    %48 = vector.broadcast %cst_29 : f32 to vector<5x256xf32>
    %49 = arith.addf %48, %47 : vector<5x256xf32>
    %50 = arith.divf %48, %49 : vector<5x256xf32>
    %51 = arith.subf %40, %50 : vector<5x256xf32>
    %c0_30 = arith.constant 0 : index
    %c0_31 = arith.constant 0 : index
    %52 = vector.load %arg12[%c0_30, %c0_31] : memref<5x256xf32, #tpu.memory_space<vmem>>, vector<5x256xf32>
    tpu.vector_store %arg12[%c0_30, %c0_31], %51 {strides = array<i32>} : memref<5x256xf32, #tpu.memory_space<vmem>>, vector<5x256xf32>,
    return
  }
  func.func @transform_0(%arg0: i32) -> (i32, i32) {
    %c0_i32 = arith.constant 0 : i32
    %c0_i32_0 = arith.constant 0 : i32
    return %c0_i32, %arg0 : i32, i32
  }
  func.func @transform_1(%arg0: i32) -> (i32, i32) {
    %c0_i32 = arith.constant 0 : i32
    %c0_i32_0 = arith.constant 0 : i32
    %c0_i32_1 = arith.constant 0 : i32
    return %c0_i32, %c0_i32_0 : i32, i32
  }
  func.func @transform_2(%arg0: i32) -> (i32, i32) {
    %c0_i32 = arith.constant 0 : i32
    %c0_i32_0 = arith.constant 0 : i32
    %c0_i32_1 = arith.constant 0 : i32
    return %c0_i32, %c0_i32_0 : i32, i32
  }
  func.func @transform_3(%arg0: i32) -> (i32, i32) {
    %c0_i32 = arith.constant 0 : i32
    %c0_i32_0 = arith.constant 0 : i32
    %c0_i32_1 = arith.constant 0 : i32
    return %c0_i32, %c0_i32_0 : i32, i32
  }
  func.func @transform_4(%arg0: i32) -> (i32, i32) {
    %c0_i32 = arith.constant 0 : i32
    %c0_i32_0 = arith.constant 0 : i32
    %c0_i32_1 = arith.constant 0 : i32
    return %c0_i32, %c0_i32_0 : i32, i32
  }
  func.func @transform_5(%arg0: i32) -> (i32, i32) {
    %c0_i32 = arith.constant 0 : i32
    %c0_i32_0 = arith.constant 0 : i32
    %c0_i32_1 = arith.constant 0 : i32
    return %c0_i32, %c0_i32_0 : i32, i32
  }
  func.func @transform_6(%arg0: i32) -> (i32, i32) {
    %c0_i32 = arith.constant 0 : i32
    %c0_i32_0 = arith.constant 0 : i32
    %c0_i32_1 = arith.constant 0 : i32
    return %c0_i32, %c0_i32_0 : i32, i32
  }
  func.func @transform_7(%arg0: i32) -> (i32, i32) {
    %c0_i32 = arith.constant 0 : i32
    %c0_i32_0 = arith.constant 0 : i32
    %c0_i32_1 = arith.constant 0 : i32
    return %c0_i32, %c0_i32_0 : i32, i32
  }
  func.func @transform_8(%arg0: i32) -> (i32, i32) {
    %c0_i32 = arith.constant 0 : i32
    %c0_i32_0 = arith.constant 0 : i32
    %c0_i32_1 = arith.constant 0 : i32
    return %c0_i32, %c0_i32_0 : i32, i32
  }
  func.func @transform_9(%arg0: i32) -> (i32, i32) {
    %c0_i32 = arith.constant 0 : i32
    %c0_i32_0 = arith.constant 0 : i32
    %c0_i32_1 = arith.constant 0 : i32
    return %c0_i32, %c0_i32_0 : i32, i32
  }
  func.func @transform_10(%arg0: i32) -> (i32, i32) {
    %c0_i32 = arith.constant 0 : i32
    %c0_i32_0 = arith.constant 0 : i32
    %c0_i32_1 = arith.constant 0 : i32
    return %c0_i32, %c0_i32_0 : i32, i32
  }
  func.func @transform_11(%arg0: i32) -> (i32, i32) {
    %c0_i32 = arith.constant 0 : i32
    %c0_i32_0 = arith.constant 0 : i32
    return %c0_i32, %arg0 : i32, i32
  }
}

</mosaic_0001>

<llo_original>
// kernel: tpu_custom_call.1
$region0: #{tpu_custom_call.1}
  #allocation0 [shape = 'u32[]', space=smem, size = 0x4, offset = 0x4, fixed_abs, tag = 'smem constant byte address 0x4 - core index']
  #allocation1 [shape = 'u32[72,128]{1,0:T(1,128)}', space=vmem, size = 0x9000, scoped, tag = 'internal scratch']
  %s0 = inlined_call_operand.vmem [shape: f32[16,512], index: 0, kind: input, shape index: {}]
  %s1 = inlined_call_operand.vmem [shape: f32[32,16], index: 1, kind: input, shape index: {}]
  %s2 = inlined_call_operand.vmem [shape: f32[32,1], index: 2, kind: input, shape index: {}]
  %s3 = inlined_call_operand.vmem [shape: f32[32,32], index: 3, kind: input, shape index: {}]
  %s4 = inlined_call_operand.vmem [shape: f32[32,1], index: 4, kind: input, shape index: {}]
  %s5 = inlined_call_operand.vmem [shape: f32[32,32], index: 5, kind: input, shape index: {}]
  %s6 = inlined_call_operand.vmem [shape: f32[32,1], index: 6, kind: input, shape index: {}]
  %s7 = inlined_call_operand.vmem [shape: f32[5,32], index: 7, kind: input, shape index: {}]
  %s8 = inlined_call_operand.vmem [shape: f32[5,1], index: 8, kind: input, shape index: {}]
  %s9 = inlined_call_operand.vmem [shape: f32[5,32], index: 9, kind: input, shape index: {}]
  %s10 = inlined_call_operand.vmem [shape: f32[5,1], index: 10, kind: input, shape index: {}]
  %s11 = inlined_call_operand.hbm [shape: f32[5,512], index: 11, kind: output, shape index: {}]
  %s12 = sld [smem:[#allocation0]]
  $region100: #{tpu_custom_call.1} parent=0
    _
  %s14 = ssub.s32 1, %s12
  %s15 = scalar_select 0, %s14, %s12
  $region1: #{tpu_custom_call.1} parent=0
    #allocation2 [shape = 'u8[32768]{0}', space=vmem, size = 0x8000, scoped, tag = 'input window, operand 0']
    #allocation3 [shape = 'u8[16384]{0}', space=vmem, size = 0x4000, scoped, tag = 'output window, operand 0']
    #allocation4 [shape = 's32[2]{0}', space=sflag, size = 0x8, scoped, tag = 'scoped memory for tpu_custom_call.1']
    %16 = vsyncpa [#allocation4], 0
    %s17 = scalar_lea.sflag [#allocation4], 1
    %18 = vsyncpa %s17, 0
    loop: start=0, step=1, limit=4
    $region2: #{tpu_custom_call.1} parent=1 // loop_pre_header
      _
    $region3: #{tpu_custom_call.1} parent=1 // loop_header
      %s20 = sphi 0, %s24
      %p21 = scmp.ge.s32.totalorder %s20, 4
      %s30 = sphi 0, %s32
      %s33 = sphi 0, %s30
      %s34 = sphi 0, %s33
      %s50 = sphi 0, %s34
      %s54 = sphi 0, %s54
      %s56 = sphi 0, %s54
      %s57 = sphi 0, %s56
      %s71 = sphi 0, %s57
      %s75 = sphi 0, %s75
      %s77 = sphi 0, %s75
      %s78 = sphi 0, %s77
      %s92 = sphi 0, %s78
      %s96 = sphi 0, %s96
      %s98 = sphi 0, %s96
      %s99 = sphi 0, %s98
      %s113 = sphi 0, %s99
      %s117 = sphi 0, %s117
      %s119 = sphi 0, %s117
      %s120 = sphi 0, %s119
      %s134 = sphi 0, %s120
      %s138 = sphi 0, %s138
      %s140 = sphi 0, %s138
      %s141 = sphi 0, %s140
      %s155 = sphi 0, %s141
      %s159 = sphi 0, %s159
      %s161 = sphi 0, %s159
      %s162 = sphi 0, %s161
      %s176 = sphi 0, %s162
      %s180 = sphi 0, %s180
      %s182 = sphi 0, %s180
      %s183 = sphi 0, %s182
      %s197 = sphi 0, %s183
      %s201 = sphi 0, %s201
      %s203 = sphi 0, %s201
      %s204 = sphi 0, %s203
      %s218 = sphi 0, %s204
      %s222 = sphi 0, %s222
      %s224 = sphi 0, %s222
      %s225 = sphi 0, %s224
      %s239 = sphi 0, %s225
      %s243 = sphi 0, %s243
      %s245 = sphi 0, %s243
      %s246 = sphi 0, %s245
      %s260 = sphi 0, %s246
      %s266 = sphi 0, %s268
      %s269 = sphi 0, %s266
      %s270 = sphi 0, %s269
      %s286 = sphi 0, %s270
    $region4: #{tpu_custom_call.1} parent=1 // loop_header_branch
      %23 = sbr.rel (%p21) target = $region8
    $region5: #{tpu_custom_call.1} parent=1 // loop_body
      %s25 = ssub.s32 %s20, 1
      %s26 = ssub.s32 %s20, 2
      %s27 = sadd.s32 %s20, 1
      %s28 = ssub.s32 %s20, %s27
      %p29 = scmp.eq.s32.totalorder %s28, 0
      %s31 = sadd.s32 %s30, 1
      %s32 = scalar_select %p29, %s30, %s31
      %p35 = pneg %p29
      %p36 = scmp.eq.s32.totalorder %s20, 1
      %p37 = por %p35, %p36
      %p38 = scmp.ne.s32.totalorder %s30, %s33
      %p39 = scmp.eq.s32.totalorder %s20, 0
      %p40 = por %p38, %p39
      %p41 = scmp.ne.s32.totalorder %s30, %s33
      %p42 = scmp.eq.s32.totalorder %s25, 1
      %p43 = por %p41, %p42
      %p44 = scmp.ne.s32.totalorder %s33, %s34
      %p45 = scmp.eq.s32.totalorder %s25, 0
      %p46 = por %p44, %p45
      %p47 = scmp.ne.s32.totalorder %s33, %s34
      %p48 = scmp.eq.s32.totalorder %s26, 1
      %p49 = por %p47, %p48
      %p51 = scmp.ne.s32.totalorder %s34, %s50
      %p52 = scmp.eq.s32.totalorder %s26, 0
      %p53 = por %p51, %p52
      %s55 = sadd.s32 %s54, 1
      %p58 = scmp.eq.s32.totalorder %s20, 1
      %p59 = scmp.ne.s32.totalorder %s54, %s56
      %p60 = scmp.eq.s32.totalorder %s20, 0
      %p61 = por %p59, %p60
      %p62 = scmp.ne.s32.totalorder %s54, %s56
      %p63 = scmp.eq.s32.totalorder %s25, 1
      %p64 = por %p62, %p63
      %p65 = scmp.ne.s32.totalorder %s56, %s57
      %p66 = scmp.eq.s32.totalorder %s25, 0
      %p67 = por %p65, %p66
      %p68 = scmp.ne.s32.totalorder %s56, %s57
      %p69 = scmp.eq.s32.totalorder %s26, 1
      %p70 = por %p68, %p69
      %p72 = scmp.ne.s32.totalorder %s57, %s71
      %p73 = scmp.eq.s32.totalorder %s26, 0
      %p74 = por %p72, %p73
      %s76 = sadd.s32 %s75, 1
      %p79 = scmp.eq.s32.totalorder %s20, 1
      %p80 = scmp.ne.s32.totalorder %s75, %s77
      %p81 = scmp.eq.s32.totalorder %s20, 0
      %p82 = por %p80, %p81
      %p83 = scmp.ne.s32.totalorder %s75, %s77
      %p84 = scmp.eq.s32.totalorder %s25, 1
      %p85 = por %p83, %p84
      %p86 = scmp.ne.s32.totalorder %s77, %s78
      %p87 = scmp.eq.s32.totalorder %s25, 0
      %p88 = por %p86, %p87
      %p89 = scmp.ne.s32.totalorder %s77, %s78
      %p90 = scmp.eq.s32.totalorder %s26, 1
      %p91 = por %p89, %p90
      %p93 = scmp.ne.s32.totalorder %s78, %s92
      %p94 = scmp.eq.s32.totalorder %s26, 0
      %p95 = por %p93, %p94
      %s97 = sadd.s32 %s96, 1
      %p100 = scmp.eq.s32.totalorder %s20, 1
      %p101 = scmp.ne.s32.totalorder %s96, %s98
      %p102 = scmp.eq.s32.totalorder %s20, 0
      %p103 = por %p101, %p102
      %p104 = scmp.ne.s32.totalorder %s96, %s98
      %p105 = scmp.eq.s32.totalorder %s25, 1
      %p106 = por %p104, %p105
      %p107 = scmp.ne.s32.totalorder %s98, %s99
      %p108 = scmp.eq.s32.totalorder %s25, 0
      %p109 = por %p107, %p108
      %p110 = scmp.ne.s32.totalorder %s98, %s99
      %p111 = scmp.eq.s32.totalorder %s26, 1
      %p112 = por %p110, %p111
      %p114 = scmp.ne.s32.totalorder %s99, %s113
      %p115 = scmp.eq.s32.totalorder %s26, 0
      %p116 = por %p114, %p115
      %s118 = sadd.s32 %s117, 1
      %p121 = scmp.eq.s32.totalorder %s20, 1
      %p122 = scmp.ne.s32.totalorder %s117, %s119
      %p123 = scmp.eq.s32.totalorder %s20, 0
      %p124 = por %p122, %p123
      %p125 = scmp.ne.s32.totalorder %s117, %s119
      %p126 = scmp.eq.s32.totalorder %s25, 1
      %p127 = por %p125, %p126
      %p128 = scmp.ne.s32.totalorder %s119, %s120
      %p129 = scmp.eq.s32.totalorder %s25, 0
      %p130 = por %p128, %p129
      %p131 = scmp.ne.s32.totalorder %s119, %s120
      %p132 = scmp.eq.s32.totalorder %s26, 1
      %p133 = por %p131, %p132
      %p135 = scmp.ne.s32.totalorder %s120, %s134
      %p136 = scmp.eq.s32.totalorder %s26, 0
      %p137 = por %p135, %p136
      %s139 = sadd.s32 %s138, 1
      %p142 = scmp.eq.s32.totalorder %s20, 1
      %p143 = scmp.ne.s32.totalorder %s138, %s140
      %p144 = scmp.eq.s32.totalorder %s20, 0
      %p145 = por %p143, %p144
      %p146 = scmp.ne.s32.totalorder %s138, %s140
      %p147 = scmp.eq.s32.totalorder %s25, 1
      %p148 = por %p146, %p147
      %p149 = scmp.ne.s32.totalorder %s140, %s141
      %p150 = scmp.eq.s32.totalorder %s25, 0
      %p151 = por %p149, %p150
      %p152 = scmp.ne.s32.totalorder %s140, %s141
      %p153 = scmp.eq.s32.totalorder %s26, 1
      %p154 = por %p152, %p153
      %p156 = scmp.ne.s32.totalorder %s141, %s155
      %p157 = scmp.eq.s32.totalorder %s26, 0
      %p158 = por %p156, %p157
      %s160 = sadd.s32 %s159, 1
      %p163 = scmp.eq.s32.totalorder %s20, 1
      %p164 = scmp.ne.s32.totalorder %s159, %s161
      %p165 = scmp.eq.s32.totalorder %s20, 0
      %p166 = por %p164, %p165
      %p167 = scmp.ne.s32.totalorder %s159, %s161
      %p168 = scmp.eq.s32.totalorder %s25, 1
      %p169 = por %p167, %p168
      %p170 = scmp.ne.s32.totalorder %s161, %s162
      %p171 = scmp.eq.s32.totalorder %s25, 0
      %p172 = por %p170, %p171
      %p173 = scmp.ne.s32.totalorder %s161, %s162
      %p174 = scmp.eq.s32.totalorder %s26, 1
      %p175 = por %p173, %p174
      %p177 = scmp.ne.s32.totalorder %s162, %s176
      %p178 = scmp.eq.s32.totalorder %s26, 0
      %p179 = por %p177, %p178
      %s181 = sadd.s32 %s180, 1
      %p184 = scmp.eq.s32.totalorder %s20, 1
      %p185 = scmp.ne.s32.totalorder %s180, %s182
      %p186 = scmp.eq.s32.totalorder %s20, 0
      %p187 = por %p185, %p186
      %p188 = scmp.ne.s32.totalorder %s180, %s182
      %p189 = scmp.eq.s32.totalorder %s25, 1
      %p190 = por %p188, %p189
      %p191 = scmp.ne.s32.totalorder %s182, %s183
      %p192 = scmp.eq.s32.totalorder %s25, 0
      %p193 = por %p191, %p192
      %p194 = scmp.ne.s32.totalorder %s182, %s183
      %p195 = scmp.eq.s32.totalorder %s26, 1
      %p196 = por %p194, %p195
      %p198 = scmp.ne.s32.totalorder %s183, %s197
      %p199 = scmp.eq.s32.totalorder %s26, 0
      %p200 = por %p198, %p199
      %s202 = sadd.s32 %s201, 1
      %p205 = scmp.eq.s32.totalorder %s20, 1
      %p206 = scmp.ne.s32.totalorder %s201, %s203
      %p207 = scmp.eq.s32.totalorder %s20, 0
      %p208 = por %p206, %p207
      %p209 = scmp.ne.s32.totalorder %s201, %s203
      %p210 = scmp.eq.s32.totalorder %s25, 1
      %p211 = por %p209, %p210
      %p212 = scmp.ne.s32.totalorder %s203, %s204
      %p213 = scmp.eq.s32.totalorder %s25, 0
      %p214 = por %p212, %p213
      %p215 = scmp.ne.s32.totalorder %s203, %s204
      %p216 = scmp.eq.s32.totalorder %s26, 1
      %p217 = por %p215, %p216
      %p219 = scmp.ne.s32.totalorder %s204, %s218
      %p220 = scmp.eq.s32.totalorder %s26, 0
      %p221 = por %p219, %p220
      %s223 = sadd.s32 %s222, 1
      %p226 = scmp.eq.s32.totalorder %s20, 1
      %p227 = scmp.ne.s32.totalorder %s222, %s224
      %p228 = scmp.eq.s32.totalorder %s20, 0
      %p229 = por %p227, %p228
      %p230 = scmp.ne.s32.totalorder %s222, %s224
      %p231 = scmp.eq.s32.totalorder %s25, 1
      %p232 = por %p230, %p231
      %p233 = scmp.ne.s32.totalorder %s224, %s225
      %p234 = scmp.eq.s32.totalorder %s25, 0
      %p235 = por %p233, %p234
      %p236 = scmp.ne.s32.totalorder %s224, %s225
      %p237 = scmp.eq.s32.totalorder %s26, 1
      %p238 = por %p236, %p237
      %p240 = scmp.ne.s32.totalorder %s225, %s239
      %p241 = scmp.eq.s32.totalorder %s26, 0
      %p242 = por %p240, %p241
      %s244 = sadd.s32 %s243, 1
      %p247 = scmp.eq.s32.totalorder %s20, 1
      %p248 = scmp.ne.s32.totalorder %s243, %s245
      %p249 = scmp.eq.s32.totalorder %s20, 0
      %p250 = por %p248, %p249
      %p251 = scmp.ne.s32.totalorder %s243, %s245
      %p252 = scmp.eq.s32.totalorder %s25, 1
      %p253 = por %p251, %p252
      %p254 = scmp.ne.s32.totalorder %s245, %s246
      %p255 = scmp.eq.s32.totalorder %s25, 0
      %p256 = por %p254, %p255
      %p257 = scmp.ne.s32.totalorder %s245, %s246
      %p258 = scmp.eq.s32.totalorder %s26, 1
      %p259 = por %p257, %p258
      %p261 = scmp.ne.s32.totalorder %s246, %s260
      %p262 = scmp.eq.s32.totalorder %s26, 0
      %p263 = por %p261, %p262
      %s264 = ssub.s32 %s20, %s27
      %p265 = scmp.eq.s32.totalorder %s264, 0
      %s267 = sadd.s32 %s266, 1
      %s268 = scalar_select %p265, %s266, %s267
      %p271 = pneg %p265
      %p272 = scmp.eq.s32.totalorder %s20, 1
      %p273 = por %p271, %p272
      %p274 = scmp.ne.s32.totalorder %s266, %s269
      %p275 = scmp.eq.s32.totalorder %s20, 0
      %p276 = por %p274, %p275
      %p277 = scmp.ne.s32.totalorder %s266, %s269
      %p278 = scmp.eq.s32.totalorder %s25, 1
      %p279 = por %p277, %p278
      %p280 = scmp.ne.s32.totalorder %s269, %s270
      %p281 = scmp.eq.s32.totalorder %s25, 0
      %p282 = por %p280, %p281
      %p283 = scmp.ne.s32.totalorder %s269, %s270
      %p284 = scmp.eq.s32.totalorder %s26, 1
      %p285 = por %p283, %p284
      %p287 = scmp.ne.s32.totalorder %s270, %s286
      %p288 = scmp.eq.s32.totalorder %s26, 0
      %p289 = por %p287, %p288
      %p290 = scmp.le.s32.totalorder 1, %s20
      %p291 = scmp.lt.s32.totalorder %s20, 3
      %p292 = pnand %p290, %p291
      %p293 = pneg %p292
      // Predicated region
      $region9: #{tpu_custom_call.1} parent=5 // pred_check
        _
      $region10: #{tpu_custom_call.1} parent=5 // pred_check_branch
        %295 = sbr.rel (%p292) target = $region12
      $region11: #{tpu_custom_call.1} parent=5 // pred_region
        %s296 = ssub.s32 %s20, 1
        // Predicated region
        $region13: #{tpu_custom_call.1} parent=11 // pred_check
          %p297 = pneg %p67
        $region14: #{tpu_custom_call.1} parent=11 // pred_check_branch
          %299 = sbr.rel (%p297) target = $region16
        $region15: #{tpu_custom_call.1} parent=11 // pred_region
          _
        $region16: #{tpu_custom_call.1} parent=11 // pred_fallthru
          _
        // Predicated region
        $region17: #{tpu_custom_call.1} parent=11 // pred_check
          %p300 = pneg %p88
        $region18: #{tpu_custom_call.1} parent=11 // pred_check_branch
          %302 = sbr.rel (%p300) target = $region20
        $region19: #{tpu_custom_call.1} parent=11 // pred_region
          _
        $region20: #{tpu_custom_call.1} parent=11 // pred_fallthru
          _
        // Predicated region
        $region21: #{tpu_custom_call.1} parent=11 // pred_check
          %p303 = pneg %p109
        $region22: #{tpu_custom_call.1} parent=11 // pred_check_branch
          %305 = sbr.rel (%p303) target = $region24
        $region23: #{tpu_custom_call.1} parent=11 // pred_region
          _
        $region24: #{tpu_custom_call.1} parent=11 // pred_fallthru
          _
        // Predicated region
        $region25: #{tpu_custom_call.1} parent=11 // pred_check
          %p306 = pneg %p130
        $region26: #{tpu_custom_call.1} parent=11 // pred_check_branch
          %308 = sbr.rel (%p306) target = $region28
        $region27: #{tpu_custom_call.1} parent=11 // pred_region
          _
        $region28: #{tpu_custom_call.1} parent=11 // pred_fallthru
          _
        // Predicated region
        $region29: #{tpu_custom_call.1} parent=11 // pred_check
          %p309 = pneg %p151
        $region30: #{tpu_custom_call.1} parent=11 // pred_check_branch
          %311 = sbr.rel (%p309) target = $region32
        $region31: #{tpu_custom_call.1} parent=11 // pred_region
          _
        $region32: #{tpu_custom_call.1} parent=11 // pred_fallthru
          _
        // Predicated region
        $region33: #{tpu_custom_call.1} parent=11 // pred_check
          %p312 = pneg %p172
        $region34: #{tpu_custom_call.1} parent=11 // pred_check_branch
          %314 = sbr.rel (%p312) target = $region36
        $region35: #{tpu_custom_call.1} parent=11 // pred_region
          _
        $region36: #{tpu_custom_call.1} parent=11 // pred_fallthru
          _
        // Predicated region
        $region37: #{tpu_custom_call.1} parent=11 // pred_check
          %p315 = pneg %p193
        $region38: #{tpu_custom_call.1} parent=11 // pred_check_branch
          %317 = sbr.rel (%p315) target = $region40
        $region39: #{tpu_custom_call.1} parent=11 // pred_region
          _
        $region40: #{tpu_custom_call.1} parent=11 // pred_fallthru
          _
        // Predicated region
        $region41: #{tpu_custom_call.1} parent=11 // pred_check
          %p318 = pneg %p214
        $region42: #{tpu_custom_call.1} parent=11 // pred_check_branch
          %320 = sbr.rel (%p318) target = $region44
        $region43: #{tpu_custom_call.1} parent=11 // pred_region
          _
        $region44: #{tpu_custom_call.1} parent=11 // pred_fallthru
          _
        // Predicated region
        $region45: #{tpu_custom_call.1} parent=11 // pred_check
          %p321 = pneg %p235
        $region46: #{tpu_custom_call.1} parent=11 // pred_check_branch
          %323 = sbr.rel (%p321) target = $region48
        $region47: #{tpu_custom_call.1} parent=11 // pred_region
          _
        $region48: #{tpu_custom_call.1} parent=11 // pred_fallthru
          _
        // Predicated region
        $region49: #{tpu_custom_call.1} parent=11 // pred_check
          %p324 = pneg %p256
        $region50: #{tpu_custom_call.1} parent=11 // pred_check_branch
          %326 = sbr.rel (%p324) target = $region52
        $region51: #{tpu_custom_call.1} parent=11 // pred_region
          _
        $region52: #{tpu_custom_call.1} parent=11 // pred_fallthru
          _
      $region12: #{tpu_custom_call.1} parent=5 // pred_fallthru
        _
      %p327 = scmp.lt.s32.totalorder %s20, 2
      // Predicated region
      $region53: #{tpu_custom_call.1} parent=5 // pred_check
        %p328 = pneg %p327
      $region54: #{tpu_custom_call.1} parent=5 // pred_check_branch
        %330 = sbr.rel (%p328) target = $region56
      $region55: #{tpu_custom_call.1} parent=5 // pred_region
        // Predicated region
        $region57: #{tpu_custom_call.1} parent=55 // pred_check
          %p331 = pneg %p40
        $region58: #{tpu_custom_call.1} parent=55 // pred_check_branch
          %333 = sbr.rel (%p331) target = $region60
        $region59: #{tpu_custom_call.1} parent=55 // pred_region
          %s334 = sand.u32 %s30, 1
          %s335 = sand.u32 %s30, 1
          %s336 = smul.addr %s335, 32
          %s337 = scalar_lea.vmem [#allocation2], %s336
          %s338 = smul.u32 2, %s20
          %s339 = smul.addr %s338, 8
          %s340 = scalar_lea.vmem %s0, %s339
          // Predicated region
          $region61: #{tpu_custom_call.1} parent=59 // pred_check
            _
          $region62: #{tpu_custom_call.1} parent=59 // pred_check_branch
            %342 = sbr.rel (0) target = $region64
          $region63: #{tpu_custom_call.1} parent=59 // pred_region
            // Predicated region
            $region65: #{tpu_custom_call.1} parent=63 // pred_check
              _
            $region66: #{tpu_custom_call.1} parent=63 // pred_check_branch
              %344 = sbr.rel (0) target = $region68
            $region67: #{tpu_custom_call.1} parent=63 // pred_region
              loop: start=0, step=1, limit=1
              $region69: #{tpu_custom_call.1} parent=67 // loop_pre_header
                _
              $region70: #{tpu_custom_call.1} parent=67 // loop_header
                %s346 = sphi 0, %s350
                %p347 = scmp.ge.s32.totalorder %s346, 1
                %s351 = sphi %s340, %s340
                %s352 = sphi %s337, %s337
              $region71: #{tpu_custom_call.1} parent=67 // loop_header_branch
                %349 = sbr.rel (%p347) target = $region75
              $region72: #{tpu_custom_call.1} parent=67 // loop_body
                %v353 = vld [vmem:[%s351] sm:$0xff]
                %354 = vst [vmem:[%s352] sm:$0xff] %v353
                %v355 = vld [vmem:[%s351 + $0x8] sm:$0xff]
                %356 = vst [vmem:[%s352 + $0x8] sm:$0xff] %v355
                %v357 = vld [vmem:[%s351 + $0x20] sm:$0xff]
                %358 = vst [vmem:[%s352 + $0x10] sm:$0xff] %v357
                %v359 = vld [vmem:[%s351 + $0x28] sm:$0xff]
                %360 = vst [vmem:[%s352 + $0x18] sm:$0xff] %v359
              $region73: #{tpu_custom_call.1} parent=67 // loop_footer
                %s350 = sadd.s32 1, %s346
              $region74: #{tpu_custom_call.1} parent=67 // loop_footer_branch
                %345 = sbr.rel target = $region70
              $region75: #{tpu_custom_call.1} parent=67 // loop_exit
                _
            $region68: #{tpu_custom_call.1} parent=63 // pred_fallthru
              _
            // Predicated region
            $region76: #{tpu_custom_call.1} parent=63 // pred_check
              _
            $region77: #{tpu_custom_call.1} parent=63 // pred_check_branch
              %362 = sbr.rel target = $region79
            $region78: #{tpu_custom_call.1} parent=63 // pred_region
              _
            $region79: #{tpu_custom_call.1} parent=63 // pred_fallthru
              _
          $region64: #{tpu_custom_call.1} parent=59 // pred_fallthru
            _
          %363 = vnop
        $region60: #{tpu_custom_call.1} parent=55 // pred_fallthru
          _
      $region56: #{tpu_custom_call.1} parent=5 // pred_fallthru
        _
      %p364 = scmp.le.s32.totalorder 1, %s20
      %p365 = scmp.lt.s32.totalorder %s20, 3
      %p366 = pnand %p364, %p365
      %p367 = pneg %p366
      // Predicated region
      $region80: #{tpu_custom_call.1} parent=5 // pred_check
        _
      $region81: #{tpu_custom_call.1} parent=5 // pred_check_branch
        %369 = sbr.rel (%p366) target = $region83
      $region82: #{tpu_custom_call.1} parent=5 // pred_region
        %s370 = ssub.s32 %s20, 1
        %s371 = sand.u32 %s33, 1
        %s372 = sand.u32 %s33, 1
        %s373 = smul.addr %s372, 32
        %s374 = scalar_lea.vmem [#allocation2], %s373
        // Predicated region
        $region84: #{tpu_custom_call.1} parent=82 // pred_check
          %p375 = pneg %p46
        $region85: #{tpu_custom_call.1} parent=82 // pred_check_branch
          %377 = sbr.rel (%p375) target = $region87
        $region86: #{tpu_custom_call.1} parent=82 // pred_region
          _
        $region87: #{tpu_custom_call.1} parent=82 // pred_fallthru
          _
        %s378 = sand.u32 %s33, 1
        %s379 = sand.u32 %s33, 1
        %s380 = smul.addr %s379, 32
        %s381 = scalar_lea.vmem [#allocation2], %s380
        %p382 = pneg %p46
        %p383 = pneg %p43
        %p384 = pneg %p67
        %p385 = pneg %p64
        %p386 = pneg %p88
        %p387 = pneg %p85
        %p388 = pneg %p109
        %p389 = pneg %p106
        %p390 = pneg %p130
        %p391 = pneg %p127
        %p392 = pneg %p151
        %p393 = pneg %p148
        %p394 = pneg %p172
        %p395 = pneg %p169
        %p396 = pneg %p193
        %p397 = pneg %p190
        %p398 = pneg %p214
        %p399 = pneg %p211
        %p400 = pneg %p235
        %p401 = pneg %p232
        %p402 = pneg %p256
        %p403 = pneg %p253
        %p404 = pneg %p282
        %p405 = pneg %p279
        %s406 = sand.u32 %s269, 1
        %s407 = scalar_lea.sflag [#allocation4], %s406
        %s408 = sand.u32 %s269, 1
        %s409 = smul.addr %s408, 16
        %s410 = scalar_lea.vmem [#allocation3], %s409
        %s411 = smul.u32 2, %s25
        %s412 = smul.u32 2, %s25
        %v413 = vld [vmem:[%s1] sm:$0xff]
        %v414 = vld [vmem:[%s1 + $0x8] sm:$0xff]
        %v415 = vld [vmem:[%s1 + $0x10] sm:$0xff]
        %v416 = vld [vmem:[%s1 + $0x18] sm:$0xff]
        %v417 = vld [vmem:[%s374] sm:$0xff]
        %v418 = vld [vmem:[%s374 + $0x8] sm:$0xff]
        %v419 = vld [vmem:[%s374 + $0x10] sm:$0xff]
        %v420 = vld [vmem:[%s374 + $0x18] sm:$0xff]
        %v421 = vld [vmem:[%s2] sm:$0xff]
        %v422 = vld [vmem:[%s2 + $0x8] sm:$0xff]
        %v423 = vld [vmem:[%s2 + $0x10] sm:$0xff]
        %v424 = vld [vmem:[%s2 + $0x18] sm:$0xff]
        %426 = vset.pattern.permute.xlu0 0
        %427 = vperm.xlu0 %426, %v421
        %v428 = vpop.permute.xlu0 %427
        %431 = vset.pattern.permute.xlu0 0
        %432 = vperm.xlu0 %431, %v422
        %v433 = vpop.permute.xlu0 %432
        %436 = vset.pattern.permute.xlu0 0
        %437 = vperm.xlu0 %436, %v423
        %v438 = vpop.permute.xlu0 %437
        %441 = vset.pattern.permute.xlu0 0
        %442 = vperm.xlu0 %441, %v424
        %v443 = vpop.permute.xlu0 %442
        %vm445 = vcmask 130048
        %v447 = vsel %vm445, %v413, 0
        %v450 = vsel %vm445, %v414, 0
        %v453 = vsel %vm445, %v415, 0
        %v456 = vsel %vm445, %v416, 0
        %458 = vmatpush.msra.mxu0 0.0
        %459 = vmatpush.msra.mxu0 0.0
        %460 = vmatpush.msra.mxu0 0.0
        %461 = vmatpush.msra.mxu0 0.0
        %462 = vmatpush.msra.mxu0 0.0
        %463 = vmatpush.msra.mxu0 0.0
        %464 = vmatpush.msra.mxu0 0.0
        %465 = vmatpush.msra.mxu0 0.0
        %466 = vmatpush.msra.mxu0 0.0
        %467 = vmatpush.msra.mxu0 0.0
        %468 = vmatpush.msra.mxu0 0.0
        %469 = vmatpush.msra.mxu0 0.0
        %470 = vmatpush.msra.mxu0 0.0
        %471 = vmatpush.msra.mxu0 0.0
        %472 = vmatpush.msra.mxu0 %v419
        %473 = vmatpush.msra.mxu0 %v417
        %474 = vmatmul.f32.gmra.mxu0 %v447
        %v475 = vpop.f32.mrf.mxu0
        %v476 = vadd.f32 %v428, %v475
        %477 = vmatmul.f32.gmra.mxu0 %v450
        %v478 = vpop.f32.mrf.mxu0
        %v479 = vadd.f32 %v433, %v478
        %480 = vmatmul.f32.gmra.mxu0 %v453
        %v481 = vpop.f32.mrf.mxu0
        %v482 = vadd.f32 %v438, %v481
        %483 = vmatmul.f32.gmra.mxu0 %v456
        %v484 = vpop.f32.mrf.mxu0
        %v485 = vadd.f32 %v443, %v484
        %486 = vdwg.mxu0
        %487 = vmatpush.msra.mxu0 0.0
        %488 = vmatpush.msra.mxu0 0.0
        %489 = vmatpush.msra.mxu0 0.0
        %490 = vmatpush.msra.mxu0 0.0
        %491 = vmatpush.msra.mxu0 0.0
        %492 = vmatpush.msra.mxu0 0.0
        %493 = vmatpush.msra.mxu0 0.0
        %494 = vmatpush.msra.mxu0 0.0
        %495 = vmatpush.msra.mxu0 0.0
        %496 = vmatpush.msra.mxu0 0.0
        %497 = vmatpush.msra.mxu0 0.0
        %498 = vmatpush.msra.mxu0 0.0
        %499 = vmatpush.msra.mxu0 0.0
        %500 = vmatpush.msra.mxu0 0.0
        %501 = vmatpush.msra.mxu0 %v420
        %502 = vmatpush.msra.mxu0 %v418
        %503 = vmatmul.f32.gmra.mxu0 %v447
        %v504 = vpop.f32.mrf.mxu0
        %v505 = vadd.f32 %v428, %v504
        %506 = vmatmul.f32.gmra.mxu0 %v450
        %v507 = vpop.f32.mrf.mxu0
        %v508 = vadd.f32 %v433, %v507
        %509 = vmatmul.f32.gmra.mxu0 %v453
        %v510 = vpop.f32.mrf.mxu0
        %v511 = vadd.f32 %v438, %v510
        %512 = vmatmul.f32.gmra.mxu0 %v456
        %v513 = vpop.f32.mrf.mxu0
        %v514 = vadd.f32 %v443, %v513
        %515 = vdwg.mxu0
        %v516 = vxor.u32 %v476, 2147483648
        %v517 = vxor.u32 %v505, 2147483648
        %v518 = vxor.u32 %v479, 2147483648
        %v519 = vxor.u32 %v508, 2147483648
        %v520 = vxor.u32 %v482, 2147483648
        %v521 = vxor.u32 %v511, 2147483648
        %v522 = vxor.u32 %v485, 2147483648
        %v523 = vxor.u32 %v514, 2147483648
        %v524 = vmul.f32 %v516, 1.442695
        %v525 = vpow.pop %v524
        %v526 = vmul.f32 %v517, 1.442695
        %v527 = vpow.pop %v526
        %v528 = vmul.f32 %v518, 1.442695
        %v529 = vpow.pop %v528
        %v530 = vmul.f32 %v519, 1.442695
        %v531 = vpow.pop %v530
        %v532 = vmul.f32 %v520, 1.442695
        %v533 = vpow.pop %v532
        %v534 = vmul.f32 %v521, 1.442695
        %v535 = vpow.pop %v534
        %v536 = vmul.f32 %v522, 1.442695
        %v537 = vpow.pop %v536
        %v538 = vmul.f32 %v523, 1.442695
        %v539 = vpow.pop %v538
        %v540 = vadd.f32 %v525, 1.0
        %v541 = vadd.f32 %v527, 1.0
        %v542 = vadd.f32 %v529, 1.0
        %v543 = vadd.f32 %v531, 1.0
        %v544 = vadd.f32 %v533, 1.0
        %v545 = vadd.f32 %v535, 1.0
        %v546 = vadd.f32 %v537, 1.0
        %v547 = vadd.f32 %v539, 1.0
        %v548 = vrcp.pop %v540
        %v549 = vmul.f32 %v540, %v548
        %v550 = vsub.f32 1.0, %v549
        %v551 = vmul.f32 %v548, %v550
        %v552 = vadd.f32 %v548, %v551
        %vm553 = vweird.f32 %v540
        %vm554 = vweird.f32 %v548
        %vm555 = vmor %vm553, %vm554
        %v556 = vsel %vm555, %v548, %v552
        %v557 = vand.u32 2147483647, %v540
        %vm558 = vcmp.eq.f32.partialorder %v557, 8.507059e+37
        %v559 = vand.u32 %v540, 2147483648
        %v560 = vor.u32 1.1754944e-38, %v559
        %v561 = vsel %vm558, %v560, %v556
        %v562 = vmul.f32 1.0, %v561
        %v563 = vrcp.pop %v541
        %v564 = vmul.f32 %v541, %v563
        %v565 = vsub.f32 1.0, %v564
        %v566 = vmul.f32 %v563, %v565
        %v567 = vadd.f32 %v563, %v566
        %vm568 = vweird.f32 %v541
        %vm569 = vweird.f32 %v563
        %vm570 = vmor %vm568, %vm569
        %v571 = vsel %vm570, %v563, %v567
        %v572 = vand.u32 2147483647, %v541
        %vm573 = vcmp.eq.f32.partialorder %v572, 8.507059e+37
        %v574 = vand.u32 %v541, 2147483648
        %v575 = vor.u32 1.1754944e-38, %v574
        %v576 = vsel %vm573, %v575, %v571
        %v577 = vmul.f32 1.0, %v576
        %v578 = vrcp.pop %v542
        %v579 = vmul.f32 %v542, %v578
        %v580 = vsub.f32 1.0, %v579
        %v581 = vmul.f32 %v578, %v580
        %v582 = vadd.f32 %v578, %v581
        %vm583 = vweird.f32 %v542
        %vm584 = vweird.f32 %v578
        %vm585 = vmor %vm583, %vm584
        %v586 = vsel %vm585, %v578, %v582
        %v587 = vand.u32 2147483647, %v542
        %vm588 = vcmp.eq.f32.partialorder %v587, 8.507059e+37
        %v589 = vand.u32 %v542, 2147483648
        %v590 = vor.u32 1.1754944e-38, %v589
        %v591 = vsel %vm588, %v590, %v586
        %v592 = vmul.f32 1.0, %v591
        %v593 = vrcp.pop %v543
        %v594 = vmul.f32 %v543, %v593
        %v595 = vsub.f32 1.0, %v594
        %v596 = vmul.f32 %v593, %v595
        %v597 = vadd.f32 %v593, %v596
        %vm598 = vweird.f32 %v543
        %vm599 = vweird.f32 %v593
        %vm600 = vmor %vm598, %vm599
        %v601 = vsel %vm600, %v593, %v597
        %v602 = vand.u32 2147483647, %v543
        %vm603 = vcmp.eq.f32.partialorder %v602, 8.507059e+37
        %v604 = vand.u32 %v543, 2147483648
        %v605 = vor.u32 1.1754944e-38, %v604
        %v606 = vsel %vm603, %v605, %v601
        %v607 = vmul.f32 1.0, %v606
        %v608 = vrcp.pop %v544
        %v609 = vmul.f32 %v544, %v608
        %v610 = vsub.f32 1.0, %v609
        %v611 = vmul.f32 %v608, %v610
        %v612 = vadd.f32 %v608, %v611
        %vm613 = vweird.f32 %v544
        %vm614 = vweird.f32 %v608
        %vm615 = vmor %vm613, %vm614
        %v616 = vsel %vm615, %v608, %v612
        %v617 = vand.u32 2147483647, %v544
        %vm618 = vcmp.eq.f32.partialorder %v617, 8.507059e+37
        %v619 = vand.u32 %v544, 2147483648
        %v620 = vor.u32 1.1754944e-38, %v619
        %v621 = vsel %vm618, %v620, %v616
        %v622 = vmul.f32 1.0, %v621
        %v623 = vrcp.pop %v545
        %v624 = vmul.f32 %v545, %v623
        %v625 = vsub.f32 1.0, %v624
        %v626 = vmul.f32 %v623, %v625
        %v627 = vadd.f32 %v623, %v626
        %vm628 = vweird.f32 %v545
        %vm629 = vweird.f32 %v623
        %vm630 = vmor %vm628, %vm629
        %v631 = vsel %vm630, %v623, %v627
        %v632 = vand.u32 2147483647, %v545
        %vm633 = vcmp.eq.f32.partialorder %v632, 8.507059e+37
        %v634 = vand.u32 %v545, 2147483648
        %v635 = vor.u32 1.1754944e-38, %v634
        %v636 = vsel %vm633, %v635, %v631
        %v637 = vmul.f32 1.0, %v636
        %v638 = vrcp.pop %v546
        %v639 = vmul.f32 %v546, %v638
        %v640 = vsub.f32 1.0, %v639
        %v641 = vmul.f32 %v638, %v640
        %v642 = vadd.f32 %v638, %v641
        %vm643 = vweird.f32 %v546
        %vm644 = vweird.f32 %v638
        %vm645 = vmor %vm643, %vm644
        %v646 = vsel %vm645, %v638, %v642
        %v647 = vand.u32 2147483647, %v546
        %vm648 = vcmp.eq.f32.partialorder %v647, 8.507059e+37
        %v649 = vand.u32 %v546, 2147483648
        %v650 = vor.u32 1.1754944e-38, %v649
        %v651 = vsel %vm648, %v650, %v646
        %v652 = vmul.f32 1.0, %v651
        %v653 = vrcp.pop %v547
        %v654 = vmul.f32 %v547, %v653
        %v655 = vsub.f32 1.0, %v654
        %v656 = vmul.f32 %v653, %v655
        %v657 = vadd.f32 %v653, %v656
        %vm658 = vweird.f32 %v547
        %vm659 = vweird.f32 %v653
        %vm660 = vmor %vm658, %vm659
        %v661 = vsel %vm660, %v653, %v657
        %v662 = vand.u32 2147483647, %v547
        %vm663 = vcmp.eq.f32.partialorder %v662, 8.507059e+37
        %v664 = vand.u32 %v547, 2147483648
        %v665 = vor.u32 1.1754944e-38, %v664
        %v666 = vsel %vm663, %v665, %v661
        %v667 = vmul.f32 1.0, %v666
        %v668 = vld [vmem:[%s3] sm:$0xff]
        %v669 = vld [vmem:[%s3 + $0x8] sm:$0xff]
        %v670 = vld [vmem:[%s3 + $0x10] sm:$0xff]
        %v671 = vld [vmem:[%s3 + $0x18] sm:$0xff]
        %v672 = vld [vmem:[%s4] sm:$0xff]
        %v673 = vld [vmem:[%s4 + $0x8] sm:$0xff]
        %v674 = vld [vmem:[%s4 + $0x10] sm:$0xff]
        %v675 = vld [vmem:[%s4 + $0x18] sm:$0xff]
        %677 = vset.pattern.permute.xlu0 0
        %678 = vperm.xlu0 %677, %v672
        %v679 = vpop.permute.xlu0 %678
        %682 = vset.pattern.permute.xlu0 0
        %683 = vperm.xlu0 %682, %v673
        %v684 = vpop.permute.xlu0 %683
        %687 = vset.pattern.permute.xlu0 0
        %688 = vperm.xlu0 %687, %v674
        %v689 = vpop.permute.xlu0 %688
        %692 = vset.pattern.permute.xlu0 0
        %693 = vperm.xlu0 %692, %v675
        %v694 = vpop.permute.xlu0 %693
        %vm696 = vcmask 261120
        %v698 = vsel %vm696, %v668, 0
        %v701 = vsel %vm696, %v669, 0
        %v704 = vsel %vm696, %v670, 0
        %v707 = vsel %vm696, %v671, 0
        %709 = vmatpush.msra.mxu0 0.0
        %710 = vmatpush.msra.mxu0 0.0
        %711 = vmatpush.msra.mxu0 0.0
        %712 = vmatpush.msra.mxu0 0.0
        %713 = vmatpush.msra.mxu0 0.0
        %714 = vmatpush.msra.mxu0 0.0
        %715 = vmatpush.msra.mxu0 0.0
        %716 = vmatpush.msra.mxu0 0.0
        %717 = vmatpush.msra.mxu0 0.0
        %718 = vmatpush.msra.mxu0 0.0
        %719 = vmatpush.msra.mxu0 0.0
        %720 = vmatpush.msra.mxu0 0.0
        %721 = vmatpush.msra.mxu0 %v652
        %722 = vmatpush.msra.mxu0 %v622
        %723 = vmatpush.msra.mxu0 %v592
        %724 = vmatpush.msra.mxu0 %v562
        %725 = vmatmul.f32.gmra.mxu0 %v698
        %v726 = vpop.f32.mrf.mxu0
        %v727 = vadd.f32 %v679, %v726
        %728 = vmatmul.f32.gmra.mxu0 %v701
        %v729 = vpop.f32.mrf.mxu0
        %v730 = vadd.f32 %v684, %v729
        %731 = vmatmul.f32.gmra.mxu0 %v704
        %v732 = vpop.f32.mrf.mxu0
        %v733 = vadd.f32 %v689, %v732
        %734 = vmatmul.f32.gmra.mxu0 %v707
        %v735 = vpop.f32.mrf.mxu0
        %v736 = vadd.f32 %v694, %v735
        %737 = vdwg.mxu0
        %738 = vmatpush.msra.mxu0 0.0
        %739 = vmatpush.msra.mxu0 0.0
        %740 = vmatpush.msra.mxu0 0.0
        %741 = vmatpush.msra.mxu0 0.0
        %742 = vmatpush.msra.mxu0 0.0
        %743 = vmatpush.msra.mxu0 0.0
        %744 = vmatpush.msra.mxu0 0.0
        %745 = vmatpush.msra.mxu0 0.0
        %746 = vmatpush.msra.mxu0 0.0
        %747 = vmatpush.msra.mxu0 0.0
        %748 = vmatpush.msra.mxu0 0.0
        %749 = vmatpush.msra.mxu0 0.0
        %750 = vmatpush.msra.mxu0 %v667
        %751 = vmatpush.msra.mxu0 %v637
        %752 = vmatpush.msra.mxu0 %v607
        %753 = vmatpush.msra.mxu0 %v577
        %754 = vmatmul.f32.gmra.mxu0 %v698
        %v755 = vpop.f32.mrf.mxu0
        %v756 = vadd.f32 %v679, %v755
        %757 = vmatmul.f32.gmra.mxu0 %v701
        %v758 = vpop.f32.mrf.mxu0
        %v759 = vadd.f32 %v684, %v758
        %760 = vmatmul.f32.gmra.mxu0 %v704
        %v761 = vpop.f32.mrf.mxu0
        %v762 = vadd.f32 %v689, %v761
        %763 = vmatmul.f32.gmra.mxu0 %v707
        %v764 = vpop.f32.mrf.mxu0
        %v765 = vadd.f32 %v694, %v764
        %766 = vdwg.mxu0
        %v767 = vxor.u32 %v727, 2147483648
        %v768 = vxor.u32 %v756, 2147483648
        %v769 = vxor.u32 %v730, 2147483648
        %v770 = vxor.u32 %v759, 2147483648
        %v771 = vxor.u32 %v733, 2147483648
        %v772 = vxor.u32 %v762, 2147483648
        %v773 = vxor.u32 %v736, 2147483648
        %v774 = vxor.u32 %v765, 2147483648
        %v775 = vmul.f32 %v767, 1.442695
        %v776 = vpow.pop %v775
        %v777 = vmul.f32 %v768, 1.442695
        %v778 = vpow.pop %v777
        %v779 = vmul.f32 %v769, 1.442695
        %v780 = vpow.pop %v779
        %v781 = vmul.f32 %v770, 1.442695
        %v782 = vpow.pop %v781
        %v783 = vmul.f32 %v771, 1.442695
        %v784 = vpow.pop %v783
        %v785 = vmul.f32 %v772, 1.442695
        %v786 = vpow.pop %v785
        %v787 = vmul.f32 %v773, 1.442695
        %v788 = vpow.pop %v787
        %v789 = vmul.f32 %v774, 1.442695
        %v790 = vpow.pop %v789
        %v791 = vadd.f32 %v776, 1.0
        %v792 = vadd.f32 %v778, 1.0
        %v793 = vadd.f32 %v780, 1.0
        %v794 = vadd.f32 %v782, 1.0
        %v795 = vadd.f32 %v784, 1.0
        %v796 = vadd.f32 %v786, 1.0
        %v797 = vadd.f32 %v788, 1.0
        %v798 = vadd.f32 %v790, 1.0
        %v799 = vrcp.pop %v791
        %v800 = vmul.f32 %v791, %v799
        %v801 = vsub.f32 1.0, %v800
        %v802 = vmul.f32 %v799, %v801
        %v803 = vadd.f32 %v799, %v802
        %vm804 = vweird.f32 %v791
        %vm805 = vweird.f32 %v799
        %vm806 = vmor %vm804, %vm805
        %v807 = vsel %vm806, %v799, %v803
        %v808 = vand.u32 2147483647, %v791
        %vm809 = vcmp.eq.f32.partialorder %v808, 8.507059e+37
        %v810 = vand.u32 %v791, 2147483648
        %v811 = vor.u32 1.1754944e-38, %v810
        %v812 = vsel %vm809, %v811, %v807
        %v813 = vmul.f32 1.0, %v812
        %v814 = vrcp.pop %v792
        %v815 = vmul.f32 %v792, %v814
        %v816 = vsub.f32 1.0, %v815
        %v817 = vmul.f32 %v814, %v816
        %v818 = vadd.f32 %v814, %v817
        %vm819 = vweird.f32 %v792
        %vm820 = vweird.f32 %v814
        %vm821 = vmor %vm819, %vm820
        %v822 = vsel %vm821, %v814, %v818
        %v823 = vand.u32 2147483647, %v792
        %vm824 = vcmp.eq.f32.partialorder %v823, 8.507059e+37
        %v825 = vand.u32 %v792, 2147483648
        %v826 = vor.u32 1.1754944e-38, %v825
        %v827 = vsel %vm824, %v826, %v822
        %v828 = vmul.f32 1.0, %v827
        %v829 = vrcp.pop %v793
        %v830 = vmul.f32 %v793, %v829
        %v831 = vsub.f32 1.0, %v830
        %v832 = vmul.f32 %v829, %v831
        %v833 = vadd.f32 %v829, %v832
        %vm834 = vweird.f32 %v793
        %vm835 = vweird.f32 %v829
        %vm836 = vmor %vm834, %vm835
        %v837 = vsel %vm836, %v829, %v833
        %v838 = vand.u32 2147483647, %v793
        %vm839 = vcmp.eq.f32.partialorder %v838, 8.507059e+37
        %v840 = vand.u32 %v793, 2147483648
        %v841 = vor.u32 1.1754944e-38, %v840
        %v842 = vsel %vm839, %v841, %v837
        %v843 = vmul.f32 1.0, %v842
        %v844 = vrcp.pop %v794
        %v845 = vmul.f32 %v794, %v844
        %v846 = vsub.f32 1.0, %v845
        %v847 = vmul.f32 %v844, %v846
        %v848 = vadd.f32 %v844, %v847
        %vm849 = vweird.f32 %v794
        %vm850 = vweird.f32 %v844
        %vm851 = vmor %vm849, %vm850
        %v852 = vsel %vm851, %v844, %v848
        %v853 = vand.u32 2147483647, %v794
        %vm854 = vcmp.eq.f32.partialorder %v853, 8.507059e+37
        %v855 = vand.u32 %v794, 2147483648
        %v856 = vor.u32 1.1754944e-38, %v855
        %v857 = vsel %vm854, %v856, %v852
        %v858 = vmul.f32 1.0, %v857
        %v859 = vrcp.pop %v795
        %v860 = vmul.f32 %v795, %v859
        %v861 = vsub.f32 1.0, %v860
        %v862 = vmul.f32 %v859, %v861
        %v863 = vadd.f32 %v859, %v862
        %vm864 = vweird.f32 %v795
        %vm865 = vweird.f32 %v859
        %vm866 = vmor %vm864, %vm865
        %v867 = vsel %vm866, %v859, %v863
        %v868 = vand.u32 2147483647, %v795
        %vm869 = vcmp.eq.f32.partialorder %v868, 8.507059e+37
        %v870 = vand.u32 %v795, 2147483648
        %v871 = vor.u32 1.1754944e-38, %v870
        %v872 = vsel %vm869, %v871, %v867
        %v873 = vmul.f32 1.0, %v872
        %v874 = vrcp.pop %v796
        %v875 = vmul.f32 %v796, %v874
        %v876 = vsub.f32 1.0, %v875
        %v877 = vmul.f32 %v874, %v876
        %v878 = vadd.f32 %v874, %v877
        %vm879 = vweird.f32 %v796
        %vm880 = vweird.f32 %v874
        %vm881 = vmor %vm879, %vm880
        %v882 = vsel %vm881, %v874, %v878
        %v883 = vand.u32 2147483647, %v796
        %vm884 = vcmp.eq.f32.partialorder %v883, 8.507059e+37
        %v885 = vand.u32 %v796, 2147483648
        %v886 = vor.u32 1.1754944e-38, %v885
        %v887 = vsel %vm884, %v886, %v882
        %v888 = vmul.f32 1.0, %v887
        %v889 = vrcp.pop %v797
        %v890 = vmul.f32 %v797, %v889
        %v891 = vsub.f32 1.0, %v890
        %v892 = vmul.f32 %v889, %v891
        %v893 = vadd.f32 %v889, %v892
        %vm894 = vweird.f32 %v797
        %vm895 = vweird.f32 %v889
        %vm896 = vmor %vm894, %vm895
        %v897 = vsel %vm896, %v889, %v893
        %v898 = vand.u32 2147483647, %v797
        %vm899 = vcmp.eq.f32.partialorder %v898, 8.507059e+37
        %v900 = vand.u32 %v797, 2147483648
        %v901 = vor.u32 1.1754944e-38, %v900
        %v902 = vsel %vm899, %v901, %v897
        %v903 = vmul.f32 1.0, %v902
        %v904 = vrcp.pop %v798
        %v905 = vmul.f32 %v798, %v904
        %v906 = vsub.f32 1.0, %v905
        %v907 = vmul.f32 %v904, %v906
        %v908 = vadd.f32 %v904, %v907
        %vm909 = vweird.f32 %v798
        %vm910 = vweird.f32 %v904
        %vm911 = vmor %vm909, %vm910
        %v912 = vsel %vm911, %v904, %v908
        %v913 = vand.u32 2147483647, %v798
        %vm914 = vcmp.eq.f32.partialorder %v913, 8.507059e+37
        %v915 = vand.u32 %v798, 2147483648
        %v916 = vor.u32 1.1754944e-38, %v915
        %v917 = vsel %vm914, %v916, %v912
        %v918 = vmul.f32 1.0, %v917
        %v919 = vld [vmem:[%s5] sm:$0xff]
        %v920 = vld [vmem:[%s5 + $0x8] sm:$0xff]
        %v921 = vld [vmem:[%s5 + $0x10] sm:$0xff]
        %v922 = vld [vmem:[%s5 + $0x18] sm:$0xff]
        %v923 = vld [vmem:[%s6] sm:$0xff]
        %v924 = vld [vmem:[%s6 + $0x8] sm:$0xff]
        %v925 = vld [vmem:[%s6 + $0x10] sm:$0xff]
        %v926 = vld [vmem:[%s6 + $0x18] sm:$0xff]
        %928 = vset.pattern.permute.xlu0 0
        %929 = vperm.xlu0 %928, %v923
        %v930 = vpop.permute.xlu0 %929
        %933 = vset.pattern.permute.xlu0 0
        %934 = vperm.xlu0 %933, %v924
        %v935 = vpop.permute.xlu0 %934
        %938 = vset.pattern.permute.xlu0 0
        %939 = vperm.xlu0 %938, %v925
        %v940 = vpop.permute.xlu0 %939
        %943 = vset.pattern.permute.xlu0 0
        %944 = vperm.xlu0 %943, %v926
        %v945 = vpop.permute.xlu0 %944
        %v948 = vsel %vm696, %v919, 0
        %v951 = vsel %vm696, %v920, 0
        %v954 = vsel %vm696, %v921, 0
        %v957 = vsel %vm696, %v922, 0
        %959 = vmatpush.msra.mxu0 0.0
        %960 = vmatpush.msra.mxu0 0.0
        %961 = vmatpush.msra.mxu0 0.0
        %962 = vmatpush.msra.mxu0 0.0
        %963 = vmatpush.msra.mxu0 0.0
        %964 = vmatpush.msra.mxu0 0.0
        %965 = vmatpush.msra.mxu0 0.0
        %966 = vmatpush.msra.mxu0 0.0
        %967 = vmatpush.msra.mxu0 0.0
        %968 = vmatpush.msra.mxu0 0.0
        %969 = vmatpush.msra.mxu0 0.0
        %970 = vmatpush.msra.mxu0 0.0
        %971 = vmatpush.msra.mxu0 %v903
        %972 = vmatpush.msra.mxu0 %v873
        %973 = vmatpush.msra.mxu0 %v843
        %974 = vmatpush.msra.mxu0 %v813
        %975 = vmatmul.f32.gmra.mxu0 %v948
        %v976 = vpop.f32.mrf.mxu0
        %v977 = vadd.f32 %v930, %v976
        %978 = vmatmul.f32.gmra.mxu0 %v951
        %v979 = vpop.f32.mrf.mxu0
        %v980 = vadd.f32 %v935, %v979
        %981 = vmatmul.f32.gmra.mxu0 %v954
        %v982 = vpop.f32.mrf.mxu0
        %v983 = vadd.f32 %v940, %v982
        %984 = vmatmul.f32.gmra.mxu0 %v957
        %v985 = vpop.f32.mrf.mxu0
        %v986 = vadd.f32 %v945, %v985
        %987 = vdwg.mxu0
        %988 = vmatpush.msra.mxu0 0.0
        %989 = vmatpush.msra.mxu0 0.0
        %990 = vmatpush.msra.mxu0 0.0
        %991 = vmatpush.msra.mxu0 0.0
        %992 = vmatpush.msra.mxu0 0.0
        %993 = vmatpush.msra.mxu0 0.0
        %994 = vmatpush.msra.mxu0 0.0
        %995 = vmatpush.msra.mxu0 0.0
        %996 = vmatpush.msra.mxu0 0.0
        %997 = vmatpush.msra.mxu0 0.0
        %998 = vmatpush.msra.mxu0 0.0
        %999 = vmatpush.msra.mxu0 0.0
        %1000 = vmatpush.msra.mxu0 %v918
        %1001 = vmatpush.msra.mxu0 %v888
        %1002 = vmatpush.msra.mxu0 %v858
        %1003 = vmatpush.msra.mxu0 %v828
        %1004 = vmatmul.f32.gmra.mxu0 %v948
        %v1005 = vpop.f32.mrf.mxu0
        %v1006 = vadd.f32 %v930, %v1005
        %1007 = vmatmul.f32.gmra.mxu0 %v951
        %v1008 = vpop.f32.mrf.mxu0
        %v1009 = vadd.f32 %v935, %v1008
        %1010 = vmatmul.f32.gmra.mxu0 %v954
        %v1011 = vpop.f32.mrf.mxu0
        %v1012 = vadd.f32 %v940, %v1011
        %1013 = vmatmul.f32.gmra.mxu0 %v957
        %v1014 = vpop.f32.mrf.mxu0
        %v1015 = vadd.f32 %v945, %v1014
        %1016 = vdwg.mxu0
        %v1017 = vxor.u32 %v977, 2147483648
        %v1018 = vxor.u32 %v1006, 2147483648
        %v1019 = vxor.u32 %v980, 2147483648
        %v1020 = vxor.u32 %v1009, 2147483648
        %v1021 = vxor.u32 %v983, 2147483648
        %v1022 = vxor.u32 %v1012, 2147483648
        %v1023 = vxor.u32 %v986, 2147483648
        %v1024 = vxor.u32 %v1015, 2147483648
        %v1025 = vmul.f32 %v1017, 1.442695
        %v1026 = vpow.pop %v1025
        %v1027 = vmul.f32 %v1018, 1.442695
        %v1028 = vpow.pop %v1027
        %v1029 = vmul.f32 %v1019, 1.442695
        %v1030 = vpow.pop %v1029
        %v1031 = vmul.f32 %v1020, 1.442695
        %v1032 = vpow.pop %v1031
        %v1033 = vmul.f32 %v1021, 1.442695
        %v1034 = vpow.pop %v1033
        %v1035 = vmul.f32 %v1022, 1.442695
        %v1036 = vpow.pop %v1035
        %v1037 = vmul.f32 %v1023, 1.442695
        %v1038 = vpow.pop %v1037
        %v1039 = vmul.f32 %v1024, 1.442695
        %v1040 = vpow.pop %v1039
        %v1041 = vadd.f32 %v1026, 1.0
        %v1042 = vadd.f32 %v1028, 1.0
        %v1043 = vadd.f32 %v1030, 1.0
        %v1044 = vadd.f32 %v1032, 1.0
        %v1045 = vadd.f32 %v1034, 1.0
        %v1046 = vadd.f32 %v1036, 1.0
        %v1047 = vadd.f32 %v1038, 1.0
        %v1048 = vadd.f32 %v1040, 1.0
        %v1049 = vrcp.pop %v1041
        %v1050 = vmul.f32 %v1041, %v1049
        %v1051 = vsub.f32 1.0, %v1050
        %v1052 = vmul.f32 %v1049, %v1051
        %v1053 = vadd.f32 %v1049, %v1052
        %vm1054 = vweird.f32 %v1041
        %vm1055 = vweird.f32 %v1049
        %vm1056 = vmor %vm1054, %vm1055
        %v1057 = vsel %vm1056, %v1049, %v1053
        %v1058 = vand.u32 2147483647, %v1041
        %vm1059 = vcmp.eq.f32.partialorder %v1058, 8.507059e+37
        %v1060 = vand.u32 %v1041, 2147483648
        %v1061 = vor.u32 1.1754944e-38, %v1060
        %v1062 = vsel %vm1059, %v1061, %v1057
        %v1063 = vmul.f32 1.0, %v1062
        %v1064 = vrcp.pop %v1042
        %v1065 = vmul.f32 %v1042, %v1064
        %v1066 = vsub.f32 1.0, %v1065
        %v1067 = vmul.f32 %v1064, %v1066
        %v1068 = vadd.f32 %v1064, %v1067
        %vm1069 = vweird.f32 %v1042
        %vm1070 = vweird.f32 %v1064
        %vm1071 = vmor %vm1069, %vm1070
        %v1072 = vsel %vm1071, %v1064, %v1068
        %v1073 = vand.u32 2147483647, %v1042
        %vm1074 = vcmp.eq.f32.partialorder %v1073, 8.507059e+37
        %v1075 = vand.u32 %v1042, 2147483648
        %v1076 = vor.u32 1.1754944e-38, %v1075
        %v1077 = vsel %vm1074, %v1076, %v1072
        %v1078 = vmul.f32 1.0, %v1077
        %v1079 = vrcp.pop %v1043
        %v1080 = vmul.f32 %v1043, %v1079
        %v1081 = vsub.f32 1.0, %v1080
        %v1082 = vmul.f32 %v1079, %v1081
        %v1083 = vadd.f32 %v1079, %v1082
        %vm1084 = vweird.f32 %v1043
        %vm1085 = vweird.f32 %v1079
        %vm1086 = vmor %vm1084, %vm1085
        %v1087 = vsel %vm1086, %v1079, %v1083
        %v1088 = vand.u32 2147483647, %v1043
        %vm1089 = vcmp.eq.f32.partialorder %v1088, 8.507059e+37
        %v1090 = vand.u32 %v1043, 2147483648
        %v1091 = vor.u32 1.1754944e-38, %v1090
        %v1092 = vsel %vm1089, %v1091, %v1087
        %v1093 = vmul.f32 1.0, %v1092
        %v1094 = vrcp.pop %v1044
        %v1095 = vmul.f32 %v1044, %v1094
        %v1096 = vsub.f32 1.0, %v1095
        %v1097 = vmul.f32 %v1094, %v1096
        %v1098 = vadd.f32 %v1094, %v1097
        %vm1099 = vweird.f32 %v1044
        %vm1100 = vweird.f32 %v1094
        %vm1101 = vmor %vm1099, %vm1100
        %v1102 = vsel %vm1101, %v1094, %v1098
        %v1103 = vand.u32 2147483647, %v1044
        %vm1104 = vcmp.eq.f32.partialorder %v1103, 8.507059e+37
        %v1105 = vand.u32 %v1044, 2147483648
        %v1106 = vor.u32 1.1754944e-38, %v1105
        %v1107 = vsel %vm1104, %v1106, %v1102
        %v1108 = vmul.f32 1.0, %v1107
        %v1109 = vrcp.pop %v1045
        %v1110 = vmul.f32 %v1045, %v1109
        %v1111 = vsub.f32 1.0, %v1110
        %v1112 = vmul.f32 %v1109, %v1111
        %v1113 = vadd.f32 %v1109, %v1112
        %vm1114 = vweird.f32 %v1045
        %vm1115 = vweird.f32 %v1109
        %vm1116 = vmor %vm1114, %vm1115
        %v1117 = vsel %vm1116, %v1109, %v1113
        %v1118 = vand.u32 2147483647, %v1045
        %vm1119 = vcmp.eq.f32.partialorder %v1118, 8.507059e+37
        %v1120 = vand.u32 %v1045, 2147483648
        %v1121 = vor.u32 1.1754944e-38, %v1120
        %v1122 = vsel %vm1119, %v1121, %v1117
        %v1123 = vmul.f32 1.0, %v1122
        %v1124 = vrcp.pop %v1046
        %v1125 = vmul.f32 %v1046, %v1124
        %v1126 = vsub.f32 1.0, %v1125
        %v1127 = vmul.f32 %v1124, %v1126
        %v1128 = vadd.f32 %v1124, %v1127
        %vm1129 = vweird.f32 %v1046
        %vm1130 = vweird.f32 %v1124
        %vm1131 = vmor %vm1129, %vm1130
        %v1132 = vsel %vm1131, %v1124, %v1128
        %v1133 = vand.u32 2147483647, %v1046
        %vm1134 = vcmp.eq.f32.partialorder %v1133, 8.507059e+37
        %v1135 = vand.u32 %v1046, 2147483648
        %v1136 = vor.u32 1.1754944e-38, %v1135
        %v1137 = vsel %vm1134, %v1136, %v1132
        %v1138 = vmul.f32 1.0, %v1137
        %v1139 = vrcp.pop %v1047
        %v1140 = vmul.f32 %v1047, %v1139
        %v1141 = vsub.f32 1.0, %v1140
        %v1142 = vmul.f32 %v1139, %v1141
        %v1143 = vadd.f32 %v1139, %v1142
        %vm1144 = vweird.f32 %v1047
        %vm1145 = vweird.f32 %v1139
        %vm1146 = vmor %vm1144, %vm1145
        %v1147 = vsel %vm1146, %v1139, %v1143
        %v1148 = vand.u32 2147483647, %v1047
        %vm1149 = vcmp.eq.f32.partialorder %v1148, 8.507059e+37
        %v1150 = vand.u32 %v1047, 2147483648
        %v1151 = vor.u32 1.1754944e-38, %v1150
        %v1152 = vsel %vm1149, %v1151, %v1147
        %v1153 = vmul.f32 1.0, %v1152
        %v1154 = vrcp.pop %v1048
        %v1155 = vmul.f32 %v1048, %v1154
        %v1156 = vsub.f32 1.0, %v1155
        %v1157 = vmul.f32 %v1154, %v1156
        %v1158 = vadd.f32 %v1154, %v1157
        %vm1159 = vweird.f32 %v1048
        %vm1160 = vweird.f32 %v1154
        %vm1161 = vmor %vm1159, %vm1160
        %v1162 = vsel %vm1161, %v1154, %v1158
        %v1163 = vand.u32 2147483647, %v1048
        %vm1164 = vcmp.eq.f32.partialorder %v1163, 8.507059e+37
        %v1165 = vand.u32 %v1048, 2147483648
        %v1166 = vor.u32 1.1754944e-38, %v1165
        %v1167 = vsel %vm1164, %v1166, %v1162
        %v1168 = vmul.f32 1.0, %v1167
        %v1169 = vld [vmem:[%s7] sm:$0x1f]
        %v1170 = vld [vmem:[%s8] sm:$0x1f]
        %1172 = vset.pattern.permute.xlu0 0
        %1173 = vperm.xlu0 %1172, %v1170
        %v1174 = vpop.permute.xlu0 %1173
        %v1177 = vsel %vm696, %v1169, 0
        %1179 = vmatpush.msra.mxu0 0.0
        %1180 = vmatpush.msra.mxu0 0.0
        %1181 = vmatpush.msra.mxu0 0.0
        %1182 = vmatpush.msra.mxu0 0.0
        %1183 = vmatpush.msra.mxu0 0.0
        %1184 = vmatpush.msra.mxu0 0.0
        %1185 = vmatpush.msra.mxu0 0.0
        %1186 = vmatpush.msra.mxu0 0.0
        %1187 = vmatpush.msra.mxu0 0.0
        %1188 = vmatpush.msra.mxu0 0.0
        %1189 = vmatpush.msra.mxu0 0.0
        %1190 = vmatpush.msra.mxu0 0.0
        %1191 = vmatpush.msra.mxu0 %v1153
        %1192 = vmatpush.msra.mxu0 %v1123
        %1193 = vmatpush.msra.mxu0 %v1093
        %1194 = vmatpush.msra.mxu0 %v1063
        %1195 = vmatmul.f32.gmra.mxu0 %v1177
        %v1196 = vpop.f32.mrf.mxu0
        %v1197 = vadd.f32 %v1174, %v1196
        %1198 = vdwg.mxu0
        %1199 = vmatpush.msra.mxu0 0.0
        %1200 = vmatpush.msra.mxu0 0.0
        %1201 = vmatpush.msra.mxu0 0.0
        %1202 = vmatpush.msra.mxu0 0.0
        %1203 = vmatpush.msra.mxu0 0.0
        %1204 = vmatpush.msra.mxu0 0.0
        %1205 = vmatpush.msra.mxu0 0.0
        %1206 = vmatpush.msra.mxu0 0.0
        %1207 = vmatpush.msra.mxu0 0.0
        %1208 = vmatpush.msra.mxu0 0.0
        %1209 = vmatpush.msra.mxu0 0.0
        %1210 = vmatpush.msra.mxu0 0.0
        %1211 = vmatpush.msra.mxu0 %v1168
        %1212 = vmatpush.msra.mxu0 %v1138
        %1213 = vmatpush.msra.mxu0 %v1108
        %1214 = vmatpush.msra.mxu0 %v1078
        %1215 = vmatmul.f32.gmra.mxu0 %v1177
        %v1216 = vpop.f32.mrf.mxu0
        %v1217 = vadd.f32 %v1174, %v1216
        %1218 = vdwg.mxu0
        %v1219 = vxor.u32 %v1197, 2147483648
        %v1220 = vxor.u32 %v1217, 2147483648
        %v1221 = vmul.f32 %v1219, 1.442695
        %v1222 = vpow.pop %v1221
        %v1223 = vmul.f32 %v1220, 1.442695
        %v1224 = vpow.pop %v1223
        %v1225 = vadd.f32 %v1222, 1.0
        %v1226 = vadd.f32 %v1224, 1.0
        %v1227 = vrcp.pop %v1225
        %v1228 = vmul.f32 %v1225, %v1227
        %v1229 = vsub.f32 1.0, %v1228
        %v1230 = vmul.f32 %v1227, %v1229
        %v1231 = vadd.f32 %v1227, %v1230
        %vm1232 = vweird.f32 %v1225
        %vm1233 = vweird.f32 %v1227
        %vm1234 = vmor %vm1232, %vm1233
        %v1235 = vsel %vm1234, %v1227, %v1231
        %v1236 = vand.u32 2147483647, %v1225
        %vm1237 = vcmp.eq.f32.partialorder %v1236, 8.507059e+37
        %v1238 = vand.u32 %v1225, 2147483648
        %v1239 = vor.u32 1.1754944e-38, %v1238
        %v1240 = vsel %vm1237, %v1239, %v1235
        %v1241 = vmul.f32 1.0, %v1240
        %v1242 = vrcp.pop %v1226
        %v1243 = vmul.f32 %v1226, %v1242
        %v1244 = vsub.f32 1.0, %v1243
        %v1245 = vmul.f32 %v1242, %v1244
        %v1246 = vadd.f32 %v1242, %v1245
        %vm1247 = vweird.f32 %v1226
        %vm1248 = vweird.f32 %v1242
        %vm1249 = vmor %vm1247, %vm1248
        %v1250 = vsel %vm1249, %v1242, %v1246
        %v1251 = vand.u32 2147483647, %v1226
        %vm1252 = vcmp.eq.f32.partialorder %v1251, 8.507059e+37
        %v1253 = vand.u32 %v1226, 2147483648
        %v1254 = vor.u32 1.1754944e-38, %v1253
        %v1255 = vsel %vm1252, %v1254, %v1250
        %v1256 = vmul.f32 1.0, %v1255
        %v1257 = vld [vmem:[%s9] sm:$0x1f]
        %v1258 = vld [vmem:[%s10] sm:$0x1f]
        %1260 = vset.pattern.permute.xlu0 0
        %1261 = vperm.xlu0 %1260, %v1258
        %v1262 = vpop.permute.xlu0 %1261
        %v1265 = vsel %vm696, %v1257, 0
        %1267 = vmatpush.msra.mxu0 0.0
        %1268 = vmatpush.msra.mxu0 0.0
        %1269 = vmatpush.msra.mxu0 0.0
        %1270 = vmatpush.msra.mxu0 0.0
        %1271 = vmatpush.msra.mxu0 0.0
        %1272 = vmatpush.msra.mxu0 0.0
        %1273 = vmatpush.msra.mxu0 0.0
        %1274 = vmatpush.msra.mxu0 0.0
        %1275 = vmatpush.msra.mxu0 0.0
        %1276 = vmatpush.msra.mxu0 0.0
        %1277 = vmatpush.msra.mxu0 0.0
        %1278 = vmatpush.msra.mxu0 0.0
        %1279 = vmatpush.msra.mxu0 %v1153
        %1280 = vmatpush.msra.mxu0 %v1123
        %1281 = vmatpush.msra.mxu0 %v1093
        %1282 = vmatpush.msra.mxu0 %v1063
        %1283 = vmatmul.f32.gmra.mxu0 %v1265
        %v1284 = vpop.f32.mrf.mxu0
        %v1285 = vadd.f32 %v1262, %v1284
        %1286 = vdwg.mxu0
        %1287 = vmatpush.msra.mxu0 0.0
        %1288 = vmatpush.msra.mxu0 0.0
        %1289 = vmatpush.msra.mxu0 0.0
        %1290 = vmatpush.msra.mxu0 0.0
        %1291 = vmatpush.msra.mxu0 0.0
        %1292 = vmatpush.msra.mxu0 0.0
        %1293 = vmatpush.msra.mxu0 0.0
        %1294 = vmatpush.msra.mxu0 0.0
        %1295 = vmatpush.msra.mxu0 0.0
        %1296 = vmatpush.msra.mxu0 0.0
        %1297 = vmatpush.msra.mxu0 0.0
        %1298 = vmatpush.msra.mxu0 0.0
        %1299 = vmatpush.msra.mxu0 %v1168
        %1300 = vmatpush.msra.mxu0 %v1138
        %1301 = vmatpush.msra.mxu0 %v1108
        %1302 = vmatpush.msra.mxu0 %v1078
        %1303 = vmatmul.f32.gmra.mxu0 %v1265
        %v1304 = vpop.f32.mrf.mxu0
        %v1305 = vadd.f32 %v1262, %v1304
        %1306 = vdwg.mxu0
        %v1307 = vxor.u32 %v1285, 2147483648
        %v1308 = vxor.u32 %v1305, 2147483648
        %v1309 = vmul.f32 %v1307, 1.442695
        %v1310 = vpow.pop %v1309
        %v1311 = vmul.f32 %v1308, 1.442695
        %v1312 = vpow.pop %v1311
        %v1313 = vadd.f32 %v1310, 1.0
        %v1314 = vadd.f32 %v1312, 1.0
        %v1315 = vrcp.pop %v1313
        %v1316 = vmul.f32 %v1313, %v1315
        %v1317 = vsub.f32 1.0, %v1316
        %v1318 = vmul.f32 %v1315, %v1317
        %v1319 = vadd.f32 %v1315, %v1318
        %vm1320 = vweird.f32 %v1313
        %vm1321 = vweird.f32 %v1315
        %vm1322 = vmor %vm1320, %vm1321
        %v1323 = vsel %vm1322, %v1315, %v1319
        %v1324 = vand.u32 2147483647, %v1313
        %vm1325 = vcmp.eq.f32.partialorder %v1324, 8.507059e+37
        %v1326 = vand.u32 %v1313, 2147483648
        %v1327 = vor.u32 1.1754944e-38, %v1326
        %v1328 = vsel %vm1325, %v1327, %v1323
        %v1329 = vmul.f32 1.0, %v1328
        %v1330 = vrcp.pop %v1314
        %v1331 = vmul.f32 %v1314, %v1330
        %v1332 = vsub.f32 1.0, %v1331
        %v1333 = vmul.f32 %v1330, %v1332
        %v1334 = vadd.f32 %v1330, %v1333
        %vm1335 = vweird.f32 %v1314
        %vm1336 = vweird.f32 %v1330
        %vm1337 = vmor %vm1335, %vm1336
        %v1338 = vsel %vm1337, %v1330, %v1334
        %v1339 = vand.u32 2147483647, %v1314
        %vm1340 = vcmp.eq.f32.partialorder %v1339, 8.507059e+37
        %v1341 = vand.u32 %v1314, 2147483648
        %v1342 = vor.u32 1.1754944e-38, %v1341
        %v1343 = vsel %vm1340, %v1342, %v1338
        %v1344 = vmul.f32 1.0, %v1343
        %v1345 = vsub.f32 %v1241, %v1329
        %v1346 = vsub.f32 %v1256, %v1344
        %1347 = vst [vmem:[%s410] sm:$0x1f] %v1345
        %1348 = vst [vmem:[%s410 + $0x8] sm:$0x1f] %v1346
        %s1349 = sand.u32 %s269, 1
        %s1350 = scalar_lea.sflag [#allocation4], %s1349
        %s1351 = sand.u32 %s269, 1
        %s1352 = smul.addr %s1351, 16
        %s1353 = scalar_lea.vmem [#allocation3], %s1352
        // Predicated region
        $region88: #{tpu_custom_call.1} parent=82 // pred_check
          %p1354 = pneg %p279
        $region89: #{tpu_custom_call.1} parent=82 // pred_check_branch
          %1356 = sbr.rel (%p1354) target = $region91
        $region90: #{tpu_custom_call.1} parent=82 // pred_region
          %s1357 = smul.u32 2, %s25
          %1359 = vsyncadd %s1350, 0
          %s1360 = smul.addr %s1357, 8
          %s1361 = scalar_lea.hbm %s11, %s1360
          %s1363 = sshll.u32 %s1353, 4
          %s1364 = int_to_ptr.vmem [resolvable:$true] %s1363
          %s1365 = sshll.u32 %s1361, 4
          %s1366 = int_to_ptr.hbm [resolvable:$true] %s1365
          %1368 = dma.vmem_to_hbm [thread:$0]  %s1364, 256, %s1366, %s1350
        $region91: #{tpu_custom_call.1} parent=82 // pred_fallthru
          _
      $region83: #{tpu_custom_call.1} parent=5 // pred_fallthru
        _
      %p1369 = scmp.le.s32.totalorder 2, %s20
      // Predicated region
      $region92: #{tpu_custom_call.1} parent=5 // pred_check
        %p1370 = pneg %p1369
      $region93: #{tpu_custom_call.1} parent=5 // pred_check_branch
        %1372 = sbr.rel (%p1370) target = $region95
      $region94: #{tpu_custom_call.1} parent=5 // pred_region
        %s1373 = ssub.s32 %s20, 2
        // Predicated region
        $region96: #{tpu_custom_call.1} parent=94 // pred_check
          %p1374 = pneg %p285
        $region97: #{tpu_custom_call.1} parent=94 // pred_check_branch
          %1376 = sbr.rel (%p1374) target = $region99
        $region98: #{tpu_custom_call.1} parent=94 // pred_region
          %s1377 = sand.u32 %s270, 1
          %s1378 = scalar_lea.sflag [#allocation4], %s1377
          %s1379 = sand.u32 %s270, 1
          %s1380 = smul.addr %s1379, 16
          %s1381 = scalar_lea.vmem [#allocation3], %s1380
          %1383 = dma.done %s1378, 256
        $region99: #{tpu_custom_call.1} parent=94 // pred_fallthru
          _
      $region95: #{tpu_custom_call.1} parent=5 // pred_fallthru
        _
    $region6: #{tpu_custom_call.1} parent=1 // loop_footer
      %s24 = sadd.s32 1, %s20
    $region7: #{tpu_custom_call.1} parent=1 // loop_footer_branch
      %19 = sbr.rel target = $region3
    $region8: #{tpu_custom_call.1} parent=1 // loop_exit
      _
    %1384 = vsyncpa [#allocation4], 1
    %s1385 = scalar_lea.sflag [#allocation4], 1
    %1386 = vsyncpa %s1385, 1

</llo_original>
